<compile_context>
chip_gen: v5e
topology: v5e:2x2
jax: 0.10.0
libtpu: 0.0.40
codegen_flags: <defaults>
</compile_context>

<pallas_src>
import jax
import jax.numpy as jnp
from jax.experimental import pallas as pl
from jax.experimental.pallas import tpu as pltpu

KSIZE = 7                      # spatial-attention conv kernel size
PAD = (KSIZE - 1) // 2         # = 3
KK = KSIZE * KSIZE             # = 49


# ---------------------------------------------------------------------------
# Fused CBAM kernel: one grid step = B_TILE batch elements, block = (bt, C, HW).
# ---------------------------------------------------------------------------
def _make_cbam_kernel(h, w, bt):
    hw = h * w
    lpad = PAD * w + PAD       # flat zero-padding on each side of a plane

    def kernel(x_ref, w1_ref, w2_ref, wsp_ref, o_ref, pk):
        # x_ref : (bt, C, HW)  lane-dense activation block
        # w1_ref: (Cr, C)      first 1x1-conv weight,  w2_ref: (C, Cr) second
        # wsp_ref: (2, 49)     spatial taps (row 0: avg plane, row 1: max plane)
        # pk    : (2, HW+2*lpad) f32 VMEM scratch; avg on sublane 0, max on 1
        c = x_ref.shape[1]

        w1 = w1_ref[...].astype(jnp.float32)                       # (Cr, C)
        w2 = w2_ref[...].astype(jnp.float32)                       # (C, Cr)

        # Constants hoisted out of the per-batch loop.
        inv_hw = jnp.full((hw, 1), 1.0 / hw, jnp.float32)           # MXU mean over HW
        inv_c = jnp.full((1, c), 1.0 / c, jnp.float32)              # MXU mean over C
        lane2 = jax.lax.broadcasted_iota(jnp.int32, (c, 2), 1)      # pool packing
        col = jax.lax.broadcasted_iota(jnp.int32, (1, hw), 1) % w
        col_ok = {}
        for kx in range(KSIZE):
            dx = kx - PAD
            if dx != 0:
                col_ok[kx] = jnp.logical_and(col + dx >= 0, col + dx < w)
        zpad2 = jnp.zeros((2, lpad), jnp.float32)

        for b in range(bt):
            x = x_ref[b].astype(jnp.float32)                        # (C, HW)

            # ---------------- channel attention ----------------
            avg_pool = jnp.dot(x, inv_hw,
                               preferred_element_type=jnp.float32)  # (C, 1) via MXU
            max_pool = jnp.max(x, axis=1, keepdims=True)            # (C, 1)
            pools = jnp.where(lane2 == 0, avg_pool, max_pool)       # (C, 2)

            hid = jnp.maximum(
                jnp.dot(w1, pools, preferred_element_type=jnp.float32), 0.0)  # (Cr, 2)
            out2 = jnp.dot(w2, hid, preferred_element_type=jnp.float32)       # (C, 2)
            ca = jax.nn.sigmoid(jnp.sum(out2, axis=1, keepdims=True))         # (C, 1)
            xg = x * ca                                                        # gated

            # ---------------- spatial attention ----------------
            avg_c = jnp.dot(inv_c, xg,
                            preferred_element_type=jnp.float32)      # (1, HW) via MXU
            max_c = jnp.max(xg, axis=0, keepdims=True)                # (1, HW)

            # Sublane-packed, flat, zero-bordered planes.  Only the small borders
            # are re-zeroed (interior fully overwritten each step -> valid under
            # "parallel" since the scratch is per-core).
            pk[:, pl.ds(0, lpad)] = zpad2
            pk[:, pl.ds(lpad + hw, lpad)] = zpad2
            pk[pl.ds(0, 1), pl.ds(lpad, hw)] = avg_c
            pk[pl.ds(1, 1), pl.ds(lpad, hw)] = max_c

            # 7x7 conv in the flat domain: tap (dy, dx) is a static window at flat
            # offset lpad + dy*w + dx.  One (2, HW) load * (2, 1) weight column per
            # tap; horizontal wrap masked once per dx group; 2 accumulators for ILP.
            acc0 = jnp.zeros((2, hw), jnp.float32)
            acc1 = jnp.zeros((2, hw), jnp.float32)
            for kx in range(KSIZE):
                dx = kx - PAD
                partial = None
                for ky in range(KSIZE):
                    off = lpad + (ky - PAD) * w + dx               # static, in-bounds
                    win = pk[:, pl.ds(off, hw)]                    # (2, HW)
                    t = ky * KSIZE + kx
                    wc = wsp_ref[:, t:t + 1]                       # (2, 1)
                    term = win * wc
                    partial = term if partial is None else partial + term
                if dx != 0:
                    partial = jnp.where(col_ok[kx], partial, 0.0)
                if kx % 2 == 0:
                    acc0 = acc0 + partial
                else:
                    acc1 = acc1 + partial

            conv = jnp.sum(acc0 + acc1, axis=0, keepdims=True)      # (1, HW)
            att = jax.nn.sigmoid(conv)
            o_ref[b] = (xg * att).astype(o_ref.dtype)               # lane-dense store

    return kernel


def _pick_batch_tile(n, per_elem_bytes, target_bytes=512 * 1024):
    """Largest divisor of n whose block stays <= target, keeping >= 2 grid steps."""
    best = 1
    for bt in range(1, n + 1):
        if n % bt:
            continue
        if bt > 1 and bt * per_elem_bytes > target_bytes:
            continue
        if n >= 2 and n // bt < 2:
            continue
        best = max(best, bt)
    return best


def cbam_forward(x, params):
    n, c, h, w = x.shape
    hw = h * w
    cr = params["w1"].shape[0]
    lpad = PAD * w + PAD
    itemsize = jnp.dtype(x.dtype).itemsize
    bt = _pick_batch_tile(n, c * hw * itemsize)
    x2d = x.reshape(n, c, hw)                                       # lane-dense view

    blk_bytes = bt * c * hw * itemsize
    # double-buffered in+out blocks + a few full-size f32 temporaries + scratch
    vmem_est = 4 * blk_bytes + 12 * c * hw * 4 + 8 * (hw + 2 * lpad) + (1 << 20)
    vmem_limit = int(min(max(vmem_est, 16 * 1024 * 1024), 64 * 1024 * 1024))

    out2d = pl.pallas_call(
        _make_cbam_kernel(h, w, bt),
        out_shape=jax.ShapeDtypeStruct((n, c, hw), x.dtype),
        grid=(n // bt,),
        in_specs=[
            pl.BlockSpec((bt, c, hw), lambda i: (i, 0, 0)),
            pl.BlockSpec((cr, c), lambda i: (0, 0)),
            pl.BlockSpec((c, cr), lambda i: (0, 0)),
            pl.BlockSpec((2, KK), lambda i: (0, 0)),
        ],
        out_specs=pl.BlockSpec((bt, c, hw), lambda i: (i, 0, 0)),
        scratch_shapes=[pltpu.VMEM((2, hw + 2 * lpad), jnp.float32)],
        compiler_params=pltpu.CompilerParams(
            dimension_semantics=("parallel",),      # v7x: shard batch over 2 TCs
            vmem_limit_bytes=vmem_limit,
        ),
    )(x2d, params["w1"], params["w2"], params["w_spatial2"])
    return out2d.reshape(n, c, h, w)


# ---------------------------------------------------------------------------
# Parameters (PyTorch-equivalent shapes) + pure-JAX reference for validation
# ---------------------------------------------------------------------------
def init_params(key, in_channels, reduction=16, kernel_size=KSIZE):
    cr = max(in_channels // reduction, 1)
    k1, k2, k3 = jax.random.split(key, 3)
    # PyTorch: fc.0 -> (Cr, C, 1, 1), fc.2 -> (C, Cr, 1, 1), conv -> (1, 2, K, K)
    w1 = jax.random.normal(k1, (cr, in_channels), jnp.float32) * 0.2
    w2 = jax.random.normal(k2, (in_channels, cr), jnp.float32) * 0.2
    w_sp = jax.random.normal(k3, (1, 2, kernel_size, kernel_size), jnp.float32) * 0.1
    kernel_params = {
        "w1": w1,                                              # (Cr, C)
        "w2": w2,                                              # (C, Cr)
        "w_spatial2": w_sp.reshape(2, kernel_size * kernel_size),  # row0 avg, row1 max
    }
    raw = {"w1": w1, "w2": w2, "w_sp": w_sp}
    return kernel_params, raw


def cbam_reference(x, w1, w2, w_sp):
    hp = jax.lax.Precision.HIGHEST
    avg = jnp.mean(x, axis=(2, 3), keepdims=True)
    mx = jnp.max(x, axis=(2, 3), keepdims=True)

    def fc(p):
        hdn = jnp.einsum("rc,ncij->nrij", w1, p, precision=hp)
        hdn = jnp.maximum(hdn, 0.0)
        return jnp.einsum("cr,nrij->ncij", w2, hdn, precision=hp)

    x = x * jax.nn.sigmoid(fc(avg) + fc(mx))

    avg_c = jnp.mean(x, axis=1, keepdims=True)
    max_c = jnp.max(x, axis=1, keepdims=True)
    att_in = jnp.concatenate([avg_c, max_c], axis=1)
    conv = jax.lax.conv_general_dilated(
        att_in, w_sp, window_strides=(1, 1),
        padding=[(PAD, PAD), (PAD, PAD)],
        dimension_numbers=("NCHW", "OIHW", "NCHW"),
        precision=hp)
    return x * jax.nn.sigmoid(conv)


if __name__ == "__main__":
    key = jax.random.PRNGKey(0)
    kx_, kp = jax.random.split(key)
    # in_channels must be >= reduction(16); use 32 -> hidden = 2
    N, C, H, W = 2, 32, 16, 16
    x = jax.random.normal(kx_, (N, C, H, W), jnp.float32)
    params, raw = init_params(kp, C, reduction=16, kernel_size=KSIZE)

    out = jax.block_until_ready(cbam_forward(x, params))

    ref = cbam_reference(x, raw["w1"], raw["w2"], raw["w_sp"])
    err = float(jnp.max(jnp.abs(out - ref)))
    assert out.shape == (N, C, H, W) and err < 1e-3, f"max abs err = {err}"
    print("KERNEL_OK")
</pallas_src>

<mosaic_0001>
module attributes {stable_mosaic.version = 11 : i64} {
  func.func @kernel(%arg0: i32, %arg1: memref<1x32x256xf32, #tpu.memory_space<vmem>>, %arg2: memref<2x32xf32, #tpu.memory_space<vmem>>, %arg3: memref<32x2xf32, #tpu.memory_space<vmem>>, %arg4: memref<2x49xf32, #tpu.memory_space<vmem>>, %arg5: memref<1x32x256xf32, #tpu.memory_space<vmem>>, %arg6: memref<2x358xf32, #tpu.memory_space<vmem>>) attributes {dimension_semantics = [#tpu.dimension_semantics<parallel>], iteration_bounds = array<i64: 2>, scalar_prefetch = 0 : i64, scratch_operands = 1 : i64, tpu.core_type = #tpu.core_type<tc>, window_params = [{transform_indices = @transform_0, window_bounds = array<i64: 1, 32, 256>}, {pipeline_mode = #tpu.pipeline_mode<synchronous>, transform_indices = @transform_1, window_bounds = array<i64: 2, 32>}, {pipeline_mode = #tpu.pipeline_mode<synchronous>, transform_indices = @transform_2, window_bounds = array<i64: 32, 2>}, {pipeline_mode = #tpu.pipeline_mode<synchronous>, transform_indices = @transform_3, window_bounds = array<i64: 2, 49>}, {transform_indices = @transform_4, window_bounds = array<i64: 1, 32, 256>}]} {
    %c0 = arith.constant 0 : index
    %c0_0 = arith.constant 0 : index
    %0 = vector.load %arg2[%c0, %c0_0] : memref<2x32xf32, #tpu.memory_space<vmem>>, vector<2x32xf32>
    %c0_1 = arith.constant 0 : index
    %c0_2 = arith.constant 0 : index
    %1 = vector.load %arg3[%c0_1, %c0_2] : memref<32x2xf32, #tpu.memory_space<vmem>>, vector<32x2xf32>
    %cst = arith.constant 3.906250e-03 : f32
    %2 = vector.broadcast %cst : f32 to vector<256x1xf32>
    %cst_3 = arith.constant 3.125000e-02 : f32
    %3 = vector.broadcast %cst_3 : f32 to vector<1x32xf32>
    %4 = tpu.iota {dimensions = array<i32: 1>} : vector<32x2xi32>
    %5 = tpu.iota {dimensions = array<i32: 1>} : vector<1x256xi32>
    %c16_i32 = arith.constant 16 : i32
    %c0_i32 = arith.constant 0 : i32
    %6 = arith.cmpi eq, %c16_i32, %c0_i32 : i32
    %c1_i32 = arith.constant 1 : i32
    %7 = arith.select %6, %c1_i32, %c16_i32 : i32
    %8 = vector.broadcast %7 : i32 to vector<1x256xi32>
    %9 = arith.remsi %5, %8 : vector<1x256xi32>
    %c0_i32_4 = arith.constant 0 : i32
    %10 = vector.broadcast %c0_i32_4 : i32 to vector<1x256xi32>
    %11 = arith.cmpi ne, %9, %10 : vector<1x256xi32>
    %c0_i32_5 = arith.constant 0 : i32
    %12 = vector.broadcast %c0_i32_5 : i32 to vector<1x256xi32>
    %13 = arith.cmpi slt, %9, %12 : vector<1x256xi32>
    %c0_i32_6 = arith.constant 0 : i32
    %14 = arith.cmpi slt, %7, %c0_i32_6 : i32
    %15 = vector.broadcast %14 : i1 to vector<1x256xi1>
    %16 = vector.broadcast %15 : vector<1x256xi1> to vector<1x256xi1>
    %17 = arith.xori %13, %16 : vector<1x256xi1>
    %18 = arith.andi %17, %11 : vector<1x256xi1>
    %19 = vector.broadcast %7 : i32 to vector<1x256xi32>
    %20 = arith.addi %9, %19 : vector<1x256xi32>
    %21 = arith.select %18, %20, %9 : vector<1x256xi1>, vector<1x256xi32>
    %c-3_i32 = arith.constant -3 : i32
    %22 = vector.broadcast %c-3_i32 : i32 to vector<1x256xi32>
    %23 = arith.addi %21, %22 : vector<1x256xi32>
    %c0_i32_7 = arith.constant 0 : i32
    %24 = vector.broadcast %c0_i32_7 : i32 to vector<1x256xi32>
    %25 = arith.cmpi sge, %23, %24 : vector<1x256xi32>
    %c-3_i32_8 = arith.constant -3 : i32
    %26 = vector.broadcast %c-3_i32_8 : i32 to vector<1x256xi32>
    %27 = arith.addi %21, %26 : vector<1x256xi32>
    %c16_i32_9 = arith.constant 16 : i32
    %28 = vector.broadcast %c16_i32_9 : i32 to vector<1x256xi32>
    %29 = arith.cmpi slt, %27, %28 : vector<1x256xi32>
    %30 = arith.andi %25, %29 : vector<1x256xi1>
    %c-2_i32 = arith.constant -2 : i32
    %31 = vector.broadcast %c-2_i32 : i32 to vector<1x256xi32>
    %32 = arith.addi %21, %31 : vector<1x256xi32>
    %c0_i32_10 = arith.constant 0 : i32
    %33 = vector.broadcast %c0_i32_10 : i32 to vector<1x256xi32>
    %34 = arith.cmpi sge, %32, %33 : vector<1x256xi32>
    %c-2_i32_11 = arith.constant -2 : i32
    %35 = vector.broadcast %c-2_i32_11 : i32 to vector<1x256xi32>
    %36 = arith.addi %21, %35 : vector<1x256xi32>
    %c16_i32_12 = arith.constant 16 : i32
    %37 = vector.broadcast %c16_i32_12 : i32 to vector<1x256xi32>
    %38 = arith.cmpi slt, %36, %37 : vector<1x256xi32>
    %39 = arith.andi %34, %38 : vector<1x256xi1>
    %c-1_i32 = arith.constant -1 : i32
    %40 = vector.broadcast %c-1_i32 : i32 to vector<1x256xi32>
    %41 = arith.addi %21, %40 : vector<1x256xi32>
    %c0_i32_13 = arith.constant 0 : i32
    %42 = vector.broadcast %c0_i32_13 : i32 to vector<1x256xi32>
    %43 = arith.cmpi sge, %41, %42 : vector<1x256xi32>
    %c-1_i32_14 = arith.constant -1 : i32
    %44 = vector.broadcast %c-1_i32_14 : i32 to vector<1x256xi32>
    %45 = arith.addi %21, %44 : vector<1x256xi32>
    %c16_i32_15 = arith.constant 16 : i32
    %46 = vector.broadcast %c16_i32_15 : i32 to vector<1x256xi32>
    %47 = arith.cmpi slt, %45, %46 : vector<1x256xi32>
    %48 = arith.andi %43, %47 : vector<1x256xi1>
    %c1_i32_16 = arith.constant 1 : i32
    %49 = vector.broadcast %c1_i32_16 : i32 to vector<1x256xi32>
    %50 = arith.addi %21, %49 : vector<1x256xi32>
    %c0_i32_17 = arith.constant 0 : i32
    %51 = vector.broadcast %c0_i32_17 : i32 to vector<1x256xi32>
    %52 = arith.cmpi sge, %50, %51 : vector<1x256xi32>
    %c1_i32_18 = arith.constant 1 : i32
    %53 = vector.broadcast %c1_i32_18 : i32 to vector<1x256xi32>
    %54 = arith.addi %21, %53 : vector<1x256xi32>
    %c16_i32_19 = arith.constant 16 : i32
    %55 = vector.broadcast %c16_i32_19 : i32 to vector<1x256xi32>
    %56 = arith.cmpi slt, %54, %55 : vector<1x256xi32>
    %57 = arith.andi %52, %56 : vector<1x256xi1>
    %c2_i32 = arith.constant 2 : i32
    %58 = vector.broadcast %c2_i32 : i32 to vector<1x256xi32>
    %59 = arith.addi %21, %58 : vector<1x256xi32>
    %c0_i32_20 = arith.constant 0 : i32
    %60 = vector.broadcast %c0_i32_20 : i32 to vector<1x256xi32>
    %61 = arith.cmpi sge, %59, %60 : vector<1x256xi32>
    %c2_i32_21 = arith.constant 2 : i32
    %62 = vector.broadcast %c2_i32_21 : i32 to vector<1x256xi32>
    %63 = arith.addi %21, %62 : vector<1x256xi32>
    %c16_i32_22 = arith.constant 16 : i32
    %64 = vector.broadcast %c16_i32_22 : i32 to vector<1x256xi32>
    %65 = arith.cmpi slt, %63, %64 : vector<1x256xi32>
    %66 = arith.andi %61, %65 : vector<1x256xi1>
    %c3_i32 = arith.constant 3 : i32
    %67 = vector.broadcast %c3_i32 : i32 to vector<1x256xi32>
    %68 = arith.addi %21, %67 : vector<1x256xi32>
    %c0_i32_23 = arith.constant 0 : i32
    %69 = vector.broadcast %c0_i32_23 : i32 to vector<1x256xi32>
    %70 = arith.cmpi sge, %68, %69 : vector<1x256xi32>
    %c3_i32_24 = arith.constant 3 : i32
    %71 = vector.broadcast %c3_i32_24 : i32 to vector<1x256xi32>
    %72 = arith.addi %21, %71 : vector<1x256xi32>
    %c16_i32_25 = arith.constant 16 : i32
    %73 = vector.broadcast %c16_i32_25 : i32 to vector<1x256xi32>
    %74 = arith.cmpi slt, %72, %73 : vector<1x256xi32>
    %75 = arith.andi %70, %74 : vector<1x256xi1>
    %cst_26 = arith.constant 0.000000e+00 : f32
    %76 = vector.broadcast %cst_26 : f32 to vector<2x51xf32>
    %c0_27 = arith.constant 0 : index
    %c0_28 = arith.constant 0 : index
    %c0_29 = arith.constant 0 : index
    %77 = vector.load %arg1[%c0_27, %c0_28, %c0_29] : memref<1x32x256xf32, #tpu.memory_space<vmem>>, vector<1x32x256xf32>
    %78 = vector.shape_cast %77 : vector<1x32x256xf32> to vector<32x256xf32>
    %cst_30 = arith.constant dense<0.000000e+00> : vector<32x1xf32>
    %79 = tpu.matmul %78, %2, %cst_30 {dimension_numbers = #tpu.dot_dimension_numbers<[1], [0], [0], [1], [0, 0, 1, 1], [], []>} : vector<32x256xf32>, vector<256x1xf32>, vector<32x1xf32> -> vector<32x1xf32>
    %cst_31 = arith.constant dense<0xFF800000> : vector<32xf32>
    %80 = vector.multi_reduction <maximumf>, %78, %cst_31 [1] : vector<32x256xf32> to vector<32xf32>
    %81 = vector.shape_cast %80 : vector<32xf32> to vector<32x1xf32>
    %c0_i32_32 = arith.constant 0 : i32
    %82 = vector.broadcast %c0_i32_32 : i32 to vector<32x2xi32>
    %83 = arith.cmpi eq, %4, %82 : vector<32x2xi32>
    %84 = vector.shape_cast %79 : vector<32x1xf32> to vector<32x1xf32>
    %85 = vector.broadcast %84 : vector<32x1xf32> to vector<32x2xf32>
    %86 = vector.shape_cast %81 : vector<32x1xf32> to vector<32x1xf32>
    %87 = vector.broadcast %86 : vector<32x1xf32> to vector<32x2xf32>
    %88 = arith.select %83, %85, %87 : vector<32x2xi1>, vector<32x2xf32>
    %cst_33 = arith.constant dense<0.000000e+00> : vector<2x2xf32>
    %89 = tpu.matmul %0, %88, %cst_33 {dimension_numbers = #tpu.dot_dimension_numbers<[1], [0], [0], [1], [0, 0, 1, 1], [], []>} : vector<2x32xf32>, vector<32x2xf32>, vector<2x2xf32> -> vector<2x2xf32>
    %cst_34 = arith.constant 0.000000e+00 : f32
    %90 = vector.broadcast %cst_34 : f32 to vector<2x2xf32>
    %91 = arith.maximumf %89, %90 : vector<2x2xf32>
    %cst_35 = arith.constant dense<0.000000e+00> : vector<32x2xf32>
    %92 = tpu.matmul %1, %91, %cst_35 {dimension_numbers = #tpu.dot_dimension_numbers<[1], [0], [0], [1], [0, 0, 1, 1], [], []>} : vector<32x2xf32>, vector<2x2xf32>, vector<32x2xf32> -> vector<32x2xf32>
    %cst_36 = arith.constant dense<0.000000e+00> : vector<32xf32>
    %93 = vector.multi_reduction <add>, %92, %cst_36 [1] : vector<32x2xf32> to vector<32xf32>
    %94 = vector.shape_cast %93 : vector<32xf32> to vector<32x1xf32>
    %95 = arith.negf %94 : vector<32x1xf32>
    %96 = math.exp %95 : vector<32x1xf32>
    %cst_37 = arith.constant 1.000000e+00 : f32
    %97 = vector.broadcast %cst_37 : f32 to vector<32x1xf32>
    %98 = arith.addf %97, %96 : vector<32x1xf32>
    %99 = arith.divf %97, %98 : vector<32x1xf32>
    %100 = vector.broadcast %99 : vector<32x1xf32> to vector<32x256xf32>
    %101 = arith.mulf %78, %100 : vector<32x256xf32>
    %cst_38 = arith.constant dense<0.000000e+00> : vector<1x256xf32>
    %102 = tpu.matmul %3, %101, %cst_38 {dimension_numbers = #tpu.dot_dimension_numbers<[1], [0], [0], [1], [0, 0, 1, 1], [], []>} : vector<1x32xf32>, vector<32x256xf32>, vector<1x256xf32> -> vector<1x256xf32>
    %cst_39 = arith.constant dense<0xFF800000> : vector<256xf32>
    %103 = vector.multi_reduction <maximumf>, %101, %cst_39 [0] : vector<32x256xf32> to vector<256xf32>
    %104 = vector.shape_cast %103 : vector<256xf32> to vector<1x256xf32>
    %c0_40 = arith.constant 0 : index
    %c0_41 = arith.constant 0 : index
    %105 = vector.load %arg6[%c0_40, %c0_41] : memref<2x358xf32, #tpu.memory_space<vmem>>, vector<2x51xf32>
    tpu.vector_store %arg6[%c0_40, %c0_41], %76 {strides = array<i32>} : memref<2x358xf32, #tpu.memory_space<vmem>>, vector<2x51xf32>,
    %c0_42 = arith.constant 0 : index
    %c307 = arith.constant 307 : index
    %106 = vector.load %arg6[%c0_42, %c307] : memref<2x358xf32, #tpu.memory_space<vmem>>, vector<2x51xf32>
    tpu.vector_store %arg6[%c0_42, %c307], %76 {strides = array<i32>} : memref<2x358xf32, #tpu.memory_space<vmem>>, vector<2x51xf32>,
    %c0_43 = arith.constant 0 : index
    %c51 = arith.constant 51 : index
    %107 = vector.load %arg6[%c0_43, %c51] : memref<2x358xf32, #tpu.memory_space<vmem>>, vector<1x256xf32>
    tpu.vector_store %arg6[%c0_43, %c51], %102 {strides = array<i32>} : memref<2x358xf32, #tpu.memory_space<vmem>>, vector<1x256xf32>,
    %c1 = arith.constant 1 : index
    %c51_44 = arith.constant 51 : index
    %108 = vector.load %arg6[%c1, %c51_44] : memref<2x358xf32, #tpu.memory_space<vmem>>, vector<1x256xf32>
    tpu.vector_store %arg6[%c1, %c51_44], %104 {strides = array<i32>} : memref<2x358xf32, #tpu.memory_space<vmem>>, vector<1x256xf32>,
    %cst_45 = arith.constant 0.000000e+00 : f32
    %109 = vector.broadcast %cst_45 : f32 to vector<2x256xf32>
    %cst_46 = arith.constant 0.000000e+00 : f32
    %110 = vector.broadcast %cst_46 : f32 to vector<2x256xf32>
    %c0_47 = arith.constant 0 : index
    %c0_48 = arith.constant 0 : index
    %111 = vector.load %arg6[%c0_47, %c0_48] : memref<2x358xf32, #tpu.memory_space<vmem>>, vector<2x256xf32>
    %c0_49 = arith.constant 0 : index
    %c0_50 = arith.constant 0 : index
    %112 = vector.load %arg4[%c0_49, %c0_50] : memref<2x49xf32, #tpu.memory_space<vmem>>, vector<2x1xf32>
    %113 = vector.broadcast %112 : vector<2x1xf32> to vector<2x256xf32>
    %114 = arith.mulf %111, %113 : vector<2x256xf32>
    %c0_51 = arith.constant 0 : index
    %c16 = arith.constant 16 : index
    %115 = vector.load %arg6[%c0_51, %c16] : memref<2x358xf32, #tpu.memory_space<vmem>>, vector<2x256xf32>
    %c0_52 = arith.constant 0 : index
    %c7 = arith.constant 7 : index
    %116 = vector.load %arg4[%c0_52, %c7] : memref<2x49xf32, #tpu.memory_space<vmem>>, vector<2x1xf32>
    %117 = vector.broadcast %116 : vector<2x1xf32> to vector<2x256xf32>
    %118 = arith.mulf %115, %117 : vector<2x256xf32>
    %119 = arith.addf %114, %118 : vector<2x256xf32>
    %c0_53 = arith.constant 0 : index
    %c32 = arith.constant 32 : index
    %120 = vector.load %arg6[%c0_53, %c32] : memref<2x358xf32, #tpu.memory_space<vmem>>, vector<2x256xf32>
    %c0_54 = arith.constant 0 : index
    %c14 = arith.constant 14 : index
    %121 = vector.load %arg4[%c0_54, %c14] : memref<2x49xf32, #tpu.memory_space<vmem>>, vector<2x1xf32>
    %122 = vector.broadcast %121 : vector<2x1xf32> to vector<2x256xf32>
    %123 = arith.mulf %120, %122 : vector<2x256xf32>
    %124 = arith.addf %119, %123 : vector<2x256xf32>
    %c0_55 = arith.constant 0 : index
    %c48 = arith.constant 48 : index
    %125 = vector.load %arg6[%c0_55, %c48] : memref<2x358xf32, #tpu.memory_space<vmem>>, vector<2x256xf32>
    %c0_56 = arith.constant 0 : index
    %c21 = arith.constant 21 : index
    %126 = vector.load %arg4[%c0_56, %c21] : memref<2x49xf32, #tpu.memory_space<vmem>>, vector<2x1xf32>
    %127 = vector.broadcast %126 : vector<2x1xf32> to vector<2x256xf32>
    %128 = arith.mulf %125, %127 : vector<2x256xf32>
    %129 = arith.addf %124, %128 : vector<2x256xf32>
    %c0_57 = arith.constant 0 : index
    %c64 = arith.constant 64 : index
    %130 = vector.load %arg6[%c0_57, %c64] : memref<2x358xf32, #tpu.memory_space<vmem>>, vector<2x256xf32>
    %c0_58 = arith.constant 0 : index
    %c28 = arith.constant 28 : index
    %131 = vector.load %arg4[%c0_58, %c28] : memref<2x49xf32, #tpu.memory_space<vmem>>, vector<2x1xf32>
    %132 = vector.broadcast %131 : vector<2x1xf32> to vector<2x256xf32>
    %133 = arith.mulf %130, %132 : vector<2x256xf32>
    %134 = arith.addf %129, %133 : vector<2x256xf32>
    %c0_59 = arith.constant 0 : index
    %c80 = arith.constant 80 : index
    %135 = vector.load %arg6[%c0_59, %c80] : memref<2x358xf32, #tpu.memory_space<vmem>>, vector<2x256xf32>
    %c0_60 = arith.constant 0 : index
    %c35 = arith.constant 35 : index
    %136 = vector.load %arg4[%c0_60, %c35] : memref<2x49xf32, #tpu.memory_space<vmem>>, vector<2x1xf32>
    %137 = vector.broadcast %136 : vector<2x1xf32> to vector<2x256xf32>
    %138 = arith.mulf %135, %137 : vector<2x256xf32>
    %139 = arith.addf %134, %138 : vector<2x256xf32>
    %c0_61 = arith.constant 0 : index
    %c96 = arith.constant 96 : index
    %140 = vector.load %arg6[%c0_61, %c96] : memref<2x358xf32, #tpu.memory_space<vmem>>, vector<2x256xf32>
    %c0_62 = arith.constant 0 : index
    %c42 = arith.constant 42 : index
    %141 = vector.load %arg4[%c0_62, %c42] : memref<2x49xf32, #tpu.memory_space<vmem>>, vector<2x1xf32>
    %142 = vector.broadcast %141 : vector<2x1xf32> to vector<2x256xf32>
    %143 = arith.mulf %140, %142 : vector<2x256xf32>
    %144 = arith.addf %139, %143 : vector<2x256xf32>
    %cst_63 = arith.constant 0.000000e+00 : f32
    %145 = vector.shape_cast %30 : vector<1x256xi1> to vector<1x256xi1>
    %146 = vector.broadcast %145 : vector<1x256xi1> to vector<2x256xi1>
    %147 = vector.broadcast %cst_63 : f32 to vector<2x256xf32>
    %148 = arith.select %146, %144, %147 : vector<2x256xi1>, vector<2x256xf32>
    %149 = arith.addf %109, %148 : vector<2x256xf32>
    %c0_64 = arith.constant 0 : index
    %c1_65 = arith.constant 1 : index
    %150 = vector.load %arg6[%c0_64, %c1_65] : memref<2x358xf32, #tpu.memory_space<vmem>>, vector<2x256xf32>
    %c0_66 = arith.constant 0 : index
    %c1_67 = arith.constant 1 : index
    %151 = vector.load %arg4[%c0_66, %c1_67] : memref<2x49xf32, #tpu.memory_space<vmem>>, vector<2x1xf32>
    %152 = vector.broadcast %151 : vector<2x1xf32> to vector<2x256xf32>
    %153 = arith.mulf %150, %152 : vector<2x256xf32>
    %c0_68 = arith.constant 0 : index
    %c17 = arith.constant 17 : index
    %154 = vector.load %arg6[%c0_68, %c17] : memref<2x358xf32, #tpu.memory_space<vmem>>, vector<2x256xf32>
    %c0_69 = arith.constant 0 : index
    %c8 = arith.constant 8 : index
    %155 = vector.load %arg4[%c0_69, %c8] : memref<2x49xf32, #tpu.memory_space<vmem>>, vector<2x1xf32>
    %156 = vector.broadcast %155 : vector<2x1xf32> to vector<2x256xf32>
    %157 = arith.mulf %154, %156 : vector<2x256xf32>
    %158 = arith.addf %153, %157 : vector<2x256xf32>
    %c0_70 = arith.constant 0 : index
    %c33 = arith.constant 33 : index
    %159 = vector.load %arg6[%c0_70, %c33] : memref<2x358xf32, #tpu.memory_space<vmem>>, vector<2x256xf32>
    %c0_71 = arith.constant 0 : index
    %c15 = arith.constant 15 : index
    %160 = vector.load %arg4[%c0_71, %c15] : memref<2x49xf32, #tpu.memory_space<vmem>>, vector<2x1xf32>
    %161 = vector.broadcast %160 : vector<2x1xf32> to vector<2x256xf32>
    %162 = arith.mulf %159, %161 : vector<2x256xf32>
    %163 = arith.addf %158, %162 : vector<2x256xf32>
    %c0_72 = arith.constant 0 : index
    %c49 = arith.constant 49 : index
    %164 = vector.load %arg6[%c0_72, %c49] : memref<2x358xf32, #tpu.memory_space<vmem>>, vector<2x256xf32>
    %c0_73 = arith.constant 0 : index
    %c22 = arith.constant 22 : index
    %165 = vector.load %arg4[%c0_73, %c22] : memref<2x49xf32, #tpu.memory_space<vmem>>, vector<2x1xf32>
    %166 = vector.broadcast %165 : vector<2x1xf32> to vector<2x256xf32>
    %167 = arith.mulf %164, %166 : vector<2x256xf32>
    %168 = arith.addf %163, %167 : vector<2x256xf32>
    %c0_74 = arith.constant 0 : index
    %c65 = arith.constant 65 : index
    %169 = vector.load %arg6[%c0_74, %c65] : memref<2x358xf32, #tpu.memory_space<vmem>>, vector<2x256xf32>
    %c0_75 = arith.constant 0 : index
    %c29 = arith.constant 29 : index
    %170 = vector.load %arg4[%c0_75, %c29] : memref<2x49xf32, #tpu.memory_space<vmem>>, vector<2x1xf32>
    %171 = vector.broadcast %170 : vector<2x1xf32> to vector<2x256xf32>
    %172 = arith.mulf %169, %171 : vector<2x256xf32>
    %173 = arith.addf %168, %172 : vector<2x256xf32>
    %c0_76 = arith.constant 0 : index
    %c81 = arith.constant 81 : index
    %174 = vector.load %arg6[%c0_76, %c81] : memref<2x358xf32, #tpu.memory_space<vmem>>, vector<2x256xf32>
    %c0_77 = arith.constant 0 : index
    %c36 = arith.constant 36 : index
    %175 = vector.load %arg4[%c0_77, %c36] : memref<2x49xf32, #tpu.memory_space<vmem>>, vector<2x1xf32>
    %176 = vector.broadcast %175 : vector<2x1xf32> to vector<2x256xf32>
    %177 = arith.mulf %174, %176 : vector<2x256xf32>
    %178 = arith.addf %173, %177 : vector<2x256xf32>
    %c0_78 = arith.constant 0 : index
    %c97 = arith.constant 97 : index
    %179 = vector.load %arg6[%c0_78, %c97] : memref<2x358xf32, #tpu.memory_space<vmem>>, vector<2x256xf32>
    %c0_79 = arith.constant 0 : index
    %c43 = arith.constant 43 : index
    %180 = vector.load %arg4[%c0_79, %c43] : memref<2x49xf32, #tpu.memory_space<vmem>>, vector<2x1xf32>
    %181 = vector.broadcast %180 : vector<2x1xf32> to vector<2x256xf32>
    %182 = arith.mulf %179, %181 : vector<2x256xf32>
    %183 = arith.addf %178, %182 : vector<2x256xf32>
    %cst_80 = arith.constant 0.000000e+00 : f32
    %184 = vector.shape_cast %39 : vector<1x256xi1> to vector<1x256xi1>
    %185 = vector.broadcast %184 : vector<1x256xi1> to vector<2x256xi1>
    %186 = vector.broadcast %cst_80 : f32 to vector<2x256xf32>
    %187 = arith.select %185, %183, %186 : vector<2x256xi1>, vector<2x256xf32>
    %188 = arith.addf %110, %187 : vector<2x256xf32>
    %c0_81 = arith.constant 0 : index
    %c2 = arith.constant 2 : index
    %189 = vector.load %arg6[%c0_81, %c2] : memref<2x358xf32, #tpu.memory_space<vmem>>, vector<2x256xf32>
    %c0_82 = arith.constant 0 : index
    %c2_83 = arith.constant 2 : index
    %190 = vector.load %arg4[%c0_82, %c2_83] : memref<2x49xf32, #tpu.memory_space<vmem>>, vector<2x1xf32>
    %191 = vector.broadcast %190 : vector<2x1xf32> to vector<2x256xf32>
    %192 = arith.mulf %189, %191 : vector<2x256xf32>
    %c0_84 = arith.constant 0 : index
    %c18 = arith.constant 18 : index
    %193 = vector.load %arg6[%c0_84, %c18] : memref<2x358xf32, #tpu.memory_space<vmem>>, vector<2x256xf32>
    %c0_85 = arith.constant 0 : index
    %c9 = arith.constant 9 : index
    %194 = vector.load %arg4[%c0_85, %c9] : memref<2x49xf32, #tpu.memory_space<vmem>>, vector<2x1xf32>
    %195 = vector.broadcast %194 : vector<2x1xf32> to vector<2x256xf32>
    %196 = arith.mulf %193, %195 : vector<2x256xf32>
    %197 = arith.addf %192, %196 : vector<2x256xf32>
    %c0_86 = arith.constant 0 : index
    %c34 = arith.constant 34 : index
    %198 = vector.load %arg6[%c0_86, %c34] : memref<2x358xf32, #tpu.memory_space<vmem>>, vector<2x256xf32>
    %c0_87 = arith.constant 0 : index
    %c16_88 = arith.constant 16 : index
    %199 = vector.load %arg4[%c0_87, %c16_88] : memref<2x49xf32, #tpu.memory_space<vmem>>, vector<2x1xf32>
    %200 = vector.broadcast %199 : vector<2x1xf32> to vector<2x256xf32>
    %201 = arith.mulf %198, %200 : vector<2x256xf32>
    %202 = arith.addf %197, %201 : vector<2x256xf32>
    %c0_89 = arith.constant 0 : index
    %c50 = arith.constant 50 : index
    %203 = vector.load %arg6[%c0_89, %c50] : memref<2x358xf32, #tpu.memory_space<vmem>>, vector<2x256xf32>
    %c0_90 = arith.constant 0 : index
    %c23 = arith.constant 23 : index
    %204 = vector.load %arg4[%c0_90, %c23] : memref<2x49xf32, #tpu.memory_space<vmem>>, vector<2x1xf32>
    %205 = vector.broadcast %204 : vector<2x1xf32> to vector<2x256xf32>
    %206 = arith.mulf %203, %205 : vector<2x256xf32>
    %207 = arith.addf %202, %206 : vector<2x256xf32>
    %c0_91 = arith.constant 0 : index
    %c66 = arith.constant 66 : index
    %208 = vector.load %arg6[%c0_91, %c66] : memref<2x358xf32, #tpu.memory_space<vmem>>, vector<2x256xf32>
    %c0_92 = arith.constant 0 : index
    %c30 = arith.constant 30 : index
    %209 = vector.load %arg4[%c0_92, %c30] : memref<2x49xf32, #tpu.memory_space<vmem>>, vector<2x1xf32>
    %210 = vector.broadcast %209 : vector<2x1xf32> to vector<2x256xf32>
    %211 = arith.mulf %208, %210 : vector<2x256xf32>
    %212 = arith.addf %207, %211 : vector<2x256xf32>
    %c0_93 = arith.constant 0 : index
    %c82 = arith.constant 82 : index
    %213 = vector.load %arg6[%c0_93, %c82] : memref<2x358xf32, #tpu.memory_space<vmem>>, vector<2x256xf32>
    %c0_94 = arith.constant 0 : index
    %c37 = arith.constant 37 : index
    %214 = vector.load %arg4[%c0_94, %c37] : memref<2x49xf32, #tpu.memory_space<vmem>>, vector<2x1xf32>
    %215 = vector.broadcast %214 : vector<2x1xf32> to vector<2x256xf32>
    %216 = arith.mulf %213, %215 : vector<2x256xf32>
    %217 = arith.addf %212, %216 : vector<2x256xf32>
    %c0_95 = arith.constant 0 : index
    %c98 = arith.constant 98 : index
    %218 = vector.load %arg6[%c0_95, %c98] : memref<2x358xf32, #tpu.memory_space<vmem>>, vector<2x256xf32>
    %c0_96 = arith.constant 0 : index
    %c44 = arith.constant 44 : index
    %219 = vector.load %arg4[%c0_96, %c44] : memref<2x49xf32, #tpu.memory_space<vmem>>, vector<2x1xf32>
    %220 = vector.broadcast %219 : vector<2x1xf32> to vector<2x256xf32>
    %221 = arith.mulf %218, %220 : vector<2x256xf32>
    %222 = arith.addf %217, %221 : vector<2x256xf32>
    %cst_97 = arith.constant 0.000000e+00 : f32
    %223 = vector.shape_cast %48 : vector<1x256xi1> to vector<1x256xi1>
    %224 = vector.broadcast %223 : vector<1x256xi1> to vector<2x256xi1>
    %225 = vector.broadcast %cst_97 : f32 to vector<2x256xf32>
    %226 = arith.select %224, %222, %225 : vector<2x256xi1>, vector<2x256xf32>
    %227 = arith.addf %149, %226 : vector<2x256xf32>
    %c0_98 = arith.constant 0 : index
    %c3 = arith.constant 3 : index
    %228 = vector.load %arg6[%c0_98, %c3] : memref<2x358xf32, #tpu.memory_space<vmem>>, vector<2x256xf32>
    %c0_99 = arith.constant 0 : index
    %c3_100 = arith.constant 3 : index
    %229 = vector.load %arg4[%c0_99, %c3_100] : memref<2x49xf32, #tpu.memory_space<vmem>>, vector<2x1xf32>
    %230 = vector.broadcast %229 : vector<2x1xf32> to vector<2x256xf32>
    %231 = arith.mulf %228, %230 : vector<2x256xf32>
    %c0_101 = arith.constant 0 : index
    %c19 = arith.constant 19 : index
    %232 = vector.load %arg6[%c0_101, %c19] : memref<2x358xf32, #tpu.memory_space<vmem>>, vector<2x256xf32>
    %c0_102 = arith.constant 0 : index
    %c10 = arith.constant 10 : index
    %233 = vector.load %arg4[%c0_102, %c10] : memref<2x49xf32, #tpu.memory_space<vmem>>, vector<2x1xf32>
    %234 = vector.broadcast %233 : vector<2x1xf32> to vector<2x256xf32>
    %235 = arith.mulf %232, %234 : vector<2x256xf32>
    %236 = arith.addf %231, %235 : vector<2x256xf32>
    %c0_103 = arith.constant 0 : index
    %c35_104 = arith.constant 35 : index
    %237 = vector.load %arg6[%c0_103, %c35_104] : memref<2x358xf32, #tpu.memory_space<vmem>>, vector<2x256xf32>
    %c0_105 = arith.constant 0 : index
    %c17_106 = arith.constant 17 : index
    %238 = vector.load %arg4[%c0_105, %c17_106] : memref<2x49xf32, #tpu.memory_space<vmem>>, vector<2x1xf32>
    %239 = vector.broadcast %238 : vector<2x1xf32> to vector<2x256xf32>
    %240 = arith.mulf %237, %239 : vector<2x256xf32>
    %241 = arith.addf %236, %240 : vector<2x256xf32>
    %c0_107 = arith.constant 0 : index
    %c51_108 = arith.constant 51 : index
    %242 = vector.load %arg6[%c0_107, %c51_108] : memref<2x358xf32, #tpu.memory_space<vmem>>, vector<2x256xf32>
    %c0_109 = arith.constant 0 : index
    %c24 = arith.constant 24 : index
    %243 = vector.load %arg4[%c0_109, %c24] : memref<2x49xf32, #tpu.memory_space<vmem>>, vector<2x1xf32>
    %244 = vector.broadcast %243 : vector<2x1xf32> to vector<2x256xf32>
    %245 = arith.mulf %242, %244 : vector<2x256xf32>
    %246 = arith.addf %241, %245 : vector<2x256xf32>
    %c0_110 = arith.constant 0 : index
    %c67 = arith.constant 67 : index
    %247 = vector.load %arg6[%c0_110, %c67] : memref<2x358xf32, #tpu.memory_space<vmem>>, vector<2x256xf32>
    %c0_111 = arith.constant 0 : index
    %c31 = arith.constant 31 : index
    %248 = vector.load %arg4[%c0_111, %c31] : memref<2x49xf32, #tpu.memory_space<vmem>>, vector<2x1xf32>
    %249 = vector.broadcast %248 : vector<2x1xf32> to vector<2x256xf32>
    %250 = arith.mulf %247, %249 : vector<2x256xf32>
    %251 = arith.addf %246, %250 : vector<2x256xf32>
    %c0_112 = arith.constant 0 : index
    %c83 = arith.constant 83 : index
    %252 = vector.load %arg6[%c0_112, %c83] : memref<2x358xf32, #tpu.memory_space<vmem>>, vector<2x256xf32>
    %c0_113 = arith.constant 0 : index
    %c38 = arith.constant 38 : index
    %253 = vector.load %arg4[%c0_113, %c38] : memref<2x49xf32, #tpu.memory_space<vmem>>, vector<2x1xf32>
    %254 = vector.broadcast %253 : vector<2x1xf32> to vector<2x256xf32>
    %255 = arith.mulf %252, %254 : vector<2x256xf32>
    %256 = arith.addf %251, %255 : vector<2x256xf32>
    %c0_114 = arith.constant 0 : index
    %c99 = arith.constant 99 : index
    %257 = vector.load %arg6[%c0_114, %c99] : memref<2x358xf32, #tpu.memory_space<vmem>>, vector<2x256xf32>
    %c0_115 = arith.constant 0 : index
    %c45 = arith.constant 45 : index
    %258 = vector.load %arg4[%c0_115, %c45] : memref<2x49xf32, #tpu.memory_space<vmem>>, vector<2x1xf32>
    %259 = vector.broadcast %258 : vector<2x1xf32> to vector<2x256xf32>
    %260 = arith.mulf %257, %259 : vector<2x256xf32>
    %261 = arith.addf %256, %260 : vector<2x256xf32>
    %262 = arith.addf %188, %261 : vector<2x256xf32>
    %c0_116 = arith.constant 0 : index
    %c4 = arith.constant 4 : index
    %263 = vector.load %arg6[%c0_116, %c4] : memref<2x358xf32, #tpu.memory_space<vmem>>, vector<2x256xf32>
    %c0_117 = arith.constant 0 : index
    %c4_118 = arith.constant 4 : index
    %264 = vector.load %arg4[%c0_117, %c4_118] : memref<2x49xf32, #tpu.memory_space<vmem>>, vector<2x1xf32>
    %265 = vector.broadcast %264 : vector<2x1xf32> to vector<2x256xf32>
    %266 = arith.mulf %263, %265 : vector<2x256xf32>
    %c0_119 = arith.constant 0 : index
    %c20 = arith.constant 20 : index
    %267 = vector.load %arg6[%c0_119, %c20] : memref<2x358xf32, #tpu.memory_space<vmem>>, vector<2x256xf32>
    %c0_120 = arith.constant 0 : index
    %c11 = arith.constant 11 : index
    %268 = vector.load %arg4[%c0_120, %c11] : memref<2x49xf32, #tpu.memory_space<vmem>>, vector<2x1xf32>
    %269 = vector.broadcast %268 : vector<2x1xf32> to vector<2x256xf32>
    %270 = arith.mulf %267, %269 : vector<2x256xf32>
    %271 = arith.addf %266, %270 : vector<2x256xf32>
    %c0_121 = arith.constant 0 : index
    %c36_122 = arith.constant 36 : index
    %272 = vector.load %arg6[%c0_121, %c36_122] : memref<2x358xf32, #tpu.memory_space<vmem>>, vector<2x256xf32>
    %c0_123 = arith.constant 0 : index
    %c18_124 = arith.constant 18 : index
    %273 = vector.load %arg4[%c0_123, %c18_124] : memref<2x49xf32, #tpu.memory_space<vmem>>, vector<2x1xf32>
    %274 = vector.broadcast %273 : vector<2x1xf32> to vector<2x256xf32>
    %275 = arith.mulf %272, %274 : vector<2x256xf32>
    %276 = arith.addf %271, %275 : vector<2x256xf32>
    %c0_125 = arith.constant 0 : index
    %c52 = arith.constant 52 : index
    %277 = vector.load %arg6[%c0_125, %c52] : memref<2x358xf32, #tpu.memory_space<vmem>>, vector<2x256xf32>
    %c0_126 = arith.constant 0 : index
    %c25 = arith.constant 25 : index
    %278 = vector.load %arg4[%c0_126, %c25] : memref<2x49xf32, #tpu.memory_space<vmem>>, vector<2x1xf32>
    %279 = vector.broadcast %278 : vector<2x1xf32> to vector<2x256xf32>
    %280 = arith.mulf %277, %279 : vector<2x256xf32>
    %281 = arith.addf %276, %280 : vector<2x256xf32>
    %c0_127 = arith.constant 0 : index
    %c68 = arith.constant 68 : index
    %282 = vector.load %arg6[%c0_127, %c68] : memref<2x358xf32, #tpu.memory_space<vmem>>, vector<2x256xf32>
    %c0_128 = arith.constant 0 : index
    %c32_129 = arith.constant 32 : index
    %283 = vector.load %arg4[%c0_128, %c32_129] : memref<2x49xf32, #tpu.memory_space<vmem>>, vector<2x1xf32>
    %284 = vector.broadcast %283 : vector<2x1xf32> to vector<2x256xf32>
    %285 = arith.mulf %282, %284 : vector<2x256xf32>
    %286 = arith.addf %281, %285 : vector<2x256xf32>
    %c0_130 = arith.constant 0 : index
    %c84 = arith.constant 84 : index
    %287 = vector.load %arg6[%c0_130, %c84] : memref<2x358xf32, #tpu.memory_space<vmem>>, vector<2x256xf32>
    %c0_131 = arith.constant 0 : index
    %c39 = arith.constant 39 : index
    %288 = vector.load %arg4[%c0_131, %c39] : memref<2x49xf32, #tpu.memory_space<vmem>>, vector<2x1xf32>
    %289 = vector.broadcast %288 : vector<2x1xf32> to vector<2x256xf32>
    %290 = arith.mulf %287, %289 : vector<2x256xf32>
    %291 = arith.addf %286, %290 : vector<2x256xf32>
    %c0_132 = arith.constant 0 : index
    %c100 = arith.constant 100 : index
    %292 = vector.load %arg6[%c0_132, %c100] : memref<2x358xf32, #tpu.memory_space<vmem>>, vector<2x256xf32>
    %c0_133 = arith.constant 0 : index
    %c46 = arith.constant 46 : index
    %293 = vector.load %arg4[%c0_133, %c46] : memref<2x49xf32, #tpu.memory_space<vmem>>, vector<2x1xf32>
    %294 = vector.broadcast %293 : vector<2x1xf32> to vector<2x256xf32>
    %295 = arith.mulf %292, %294 : vector<2x256xf32>
    %296 = arith.addf %291, %295 : vector<2x256xf32>
    %cst_134 = arith.constant 0.000000e+00 : f32
    %297 = vector.shape_cast %57 : vector<1x256xi1> to vector<1x256xi1>
    %298 = vector.broadcast %297 : vector<1x256xi1> to vector<2x256xi1>
    %299 = vector.broadcast %cst_134 : f32 to vector<2x256xf32>
    %300 = arith.select %298, %296, %299 : vector<2x256xi1>, vector<2x256xf32>
    %301 = arith.addf %227, %300 : vector<2x256xf32>
    %c0_135 = arith.constant 0 : index
    %c5 = arith.constant 5 : index
    %302 = vector.load %arg6[%c0_135, %c5] : memref<2x358xf32, #tpu.memory_space<vmem>>, vector<2x256xf32>
    %c0_136 = arith.constant 0 : index
    %c5_137 = arith.constant 5 : index
    %303 = vector.load %arg4[%c0_136, %c5_137] : memref<2x49xf32, #tpu.memory_space<vmem>>, vector<2x1xf32>
    %304 = vector.broadcast %303 : vector<2x1xf32> to vector<2x256xf32>
    %305 = arith.mulf %302, %304 : vector<2x256xf32>
    %c0_138 = arith.constant 0 : index
    %c21_139 = arith.constant 21 : index
    %306 = vector.load %arg6[%c0_138, %c21_139] : memref<2x358xf32, #tpu.memory_space<vmem>>, vector<2x256xf32>
    %c0_140 = arith.constant 0 : index
    %c12 = arith.constant 12 : index
    %307 = vector.load %arg4[%c0_140, %c12] : memref<2x49xf32, #tpu.memory_space<vmem>>, vector<2x1xf32>
    %308 = vector.broadcast %307 : vector<2x1xf32> to vector<2x256xf32>
    %309 = arith.mulf %306, %308 : vector<2x256xf32>
    %310 = arith.addf %305, %309 : vector<2x256xf32>
    %c0_141 = arith.constant 0 : index
    %c37_142 = arith.constant 37 : index
    %311 = vector.load %arg6[%c0_141, %c37_142] : memref<2x358xf32, #tpu.memory_space<vmem>>, vector<2x256xf32>
    %c0_143 = arith.constant 0 : index
    %c19_144 = arith.constant 19 : index
    %312 = vector.load %arg4[%c0_143, %c19_144] : memref<2x49xf32, #tpu.memory_space<vmem>>, vector<2x1xf32>
    %313 = vector.broadcast %312 : vector<2x1xf32> to vector<2x256xf32>
    %314 = arith.mulf %311, %313 : vector<2x256xf32>
    %315 = arith.addf %310, %314 : vector<2x256xf32>
    %c0_145 = arith.constant 0 : index
    %c53 = arith.constant 53 : index
    %316 = vector.load %arg6[%c0_145, %c53] : memref<2x358xf32, #tpu.memory_space<vmem>>, vector<2x256xf32>
    %c0_146 = arith.constant 0 : index
    %c26 = arith.constant 26 : index
    %317 = vector.load %arg4[%c0_146, %c26] : memref<2x49xf32, #tpu.memory_space<vmem>>, vector<2x1xf32>
    %318 = vector.broadcast %317 : vector<2x1xf32> to vector<2x256xf32>
    %319 = arith.mulf %316, %318 : vector<2x256xf32>
    %320 = arith.addf %315, %319 : vector<2x256xf32>
    %c0_147 = arith.constant 0 : index
    %c69 = arith.constant 69 : index
    %321 = vector.load %arg6[%c0_147, %c69] : memref<2x358xf32, #tpu.memory_space<vmem>>, vector<2x256xf32>
    %c0_148 = arith.constant 0 : index
    %c33_149 = arith.constant 33 : index
    %322 = vector.load %arg4[%c0_148, %c33_149] : memref<2x49xf32, #tpu.memory_space<vmem>>, vector<2x1xf32>
    %323 = vector.broadcast %322 : vector<2x1xf32> to vector<2x256xf32>
    %324 = arith.mulf %321, %323 : vector<2x256xf32>
    %325 = arith.addf %320, %324 : vector<2x256xf32>
    %c0_150 = arith.constant 0 : index
    %c85 = arith.constant 85 : index
    %326 = vector.load %arg6[%c0_150, %c85] : memref<2x358xf32, #tpu.memory_space<vmem>>, vector<2x256xf32>
    %c0_151 = arith.constant 0 : index
    %c40 = arith.constant 40 : index
    %327 = vector.load %arg4[%c0_151, %c40] : memref<2x49xf32, #tpu.memory_space<vmem>>, vector<2x1xf32>
    %328 = vector.broadcast %327 : vector<2x1xf32> to vector<2x256xf32>
    %329 = arith.mulf %326, %328 : vector<2x256xf32>
    %330 = arith.addf %325, %329 : vector<2x256xf32>
    %c0_152 = arith.constant 0 : index
    %c101 = arith.constant 101 : index
    %331 = vector.load %arg6[%c0_152, %c101] : memref<2x358xf32, #tpu.memory_space<vmem>>, vector<2x256xf32>
    %c0_153 = arith.constant 0 : index
    %c47 = arith.constant 47 : index
    %332 = vector.load %arg4[%c0_153, %c47] : memref<2x49xf32, #tpu.memory_space<vmem>>, vector<2x1xf32>
    %333 = vector.broadcast %332 : vector<2x1xf32> to vector<2x256xf32>
    %334 = arith.mulf %331, %333 : vector<2x256xf32>
    %335 = arith.addf %330, %334 : vector<2x256xf32>
    %cst_154 = arith.constant 0.000000e+00 : f32
    %336 = vector.shape_cast %66 : vector<1x256xi1> to vector<1x256xi1>
    %337 = vector.broadcast %336 : vector<1x256xi1> to vector<2x256xi1>
    %338 = vector.broadcast %cst_154 : f32 to vector<2x256xf32>
    %339 = arith.select %337, %335, %338 : vector<2x256xi1>, vector<2x256xf32>
    %340 = arith.addf %262, %339 : vector<2x256xf32>
    %c0_155 = arith.constant 0 : index
    %c6 = arith.constant 6 : index
    %341 = vector.load %arg6[%c0_155, %c6] : memref<2x358xf32, #tpu.memory_space<vmem>>, vector<2x256xf32>
    %c0_156 = arith.constant 0 : index
    %c6_157 = arith.constant 6 : index
    %342 = vector.load %arg4[%c0_156, %c6_157] : memref<2x49xf32, #tpu.memory_space<vmem>>, vector<2x1xf32>
    %343 = vector.broadcast %342 : vector<2x1xf32> to vector<2x256xf32>
    %344 = arith.mulf %341, %343 : vector<2x256xf32>
    %c0_158 = arith.constant 0 : index
    %c22_159 = arith.constant 22 : index
    %345 = vector.load %arg6[%c0_158, %c22_159] : memref<2x358xf32, #tpu.memory_space<vmem>>, vector<2x256xf32>
    %c0_160 = arith.constant 0 : index
    %c13 = arith.constant 13 : index
    %346 = vector.load %arg4[%c0_160, %c13] : memref<2x49xf32, #tpu.memory_space<vmem>>, vector<2x1xf32>
    %347 = vector.broadcast %346 : vector<2x1xf32> to vector<2x256xf32>
    %348 = arith.mulf %345, %347 : vector<2x256xf32>
    %349 = arith.addf %344, %348 : vector<2x256xf32>
    %c0_161 = arith.constant 0 : index
    %c38_162 = arith.constant 38 : index
    %350 = vector.load %arg6[%c0_161, %c38_162] : memref<2x358xf32, #tpu.memory_space<vmem>>, vector<2x256xf32>
    %c0_163 = arith.constant 0 : index
    %c20_164 = arith.constant 20 : index
    %351 = vector.load %arg4[%c0_163, %c20_164] : memref<2x49xf32, #tpu.memory_space<vmem>>, vector<2x1xf32>
    %352 = vector.broadcast %351 : vector<2x1xf32> to vector<2x256xf32>
    %353 = arith.mulf %350, %352 : vector<2x256xf32>
    %354 = arith.addf %349, %353 : vector<2x256xf32>
    %c0_165 = arith.constant 0 : index
    %c54 = arith.constant 54 : index
    %355 = vector.load %arg6[%c0_165, %c54] : memref<2x358xf32, #tpu.memory_space<vmem>>, vector<2x256xf32>
    %c0_166 = arith.constant 0 : index
    %c27 = arith.constant 27 : index
    %356 = vector.load %arg4[%c0_166, %c27] : memref<2x49xf32, #tpu.memory_space<vmem>>, vector<2x1xf32>
    %357 = vector.broadcast %356 : vector<2x1xf32> to vector<2x256xf32>
    %358 = arith.mulf %355, %357 : vector<2x256xf32>
    %359 = arith.addf %354, %358 : vector<2x256xf32>
    %c0_167 = arith.constant 0 : index
    %c70 = arith.constant 70 : index
    %360 = vector.load %arg6[%c0_167, %c70] : memref<2x358xf32, #tpu.memory_space<vmem>>, vector<2x256xf32>
    %c0_168 = arith.constant 0 : index
    %c34_169 = arith.constant 34 : index
    %361 = vector.load %arg4[%c0_168, %c34_169] : memref<2x49xf32, #tpu.memory_space<vmem>>, vector<2x1xf32>
    %362 = vector.broadcast %361 : vector<2x1xf32> to vector<2x256xf32>
    %363 = arith.mulf %360, %362 : vector<2x256xf32>
    %364 = arith.addf %359, %363 : vector<2x256xf32>
    %c0_170 = arith.constant 0 : index
    %c86 = arith.constant 86 : index
    %365 = vector.load %arg6[%c0_170, %c86] : memref<2x358xf32, #tpu.memory_space<vmem>>, vector<2x256xf32>
    %c0_171 = arith.constant 0 : index
    %c41 = arith.constant 41 : index
    %366 = vector.load %arg4[%c0_171, %c41] : memref<2x49xf32, #tpu.memory_space<vmem>>, vector<2x1xf32>
    %367 = vector.broadcast %366 : vector<2x1xf32> to vector<2x256xf32>
    %368 = arith.mulf %365, %367 : vector<2x256xf32>
    %369 = arith.addf %364, %368 : vector<2x256xf32>
    %c0_172 = arith.constant 0 : index
    %c102 = arith.constant 102 : index
    %370 = vector.load %arg6[%c0_172, %c102] : memref<2x358xf32, #tpu.memory_space<vmem>>, vector<2x256xf32>
    %c0_173 = arith.constant 0 : index
    %c48_174 = arith.constant 48 : index
    %371 = vector.load %arg4[%c0_173, %c48_174] : memref<2x49xf32, #tpu.memory_space<vmem>>, vector<2x1xf32>
    %372 = vector.broadcast %371 : vector<2x1xf32> to vector<2x256xf32>
    %373 = arith.mulf %370, %372 : vector<2x256xf32>
    %374 = arith.addf %369, %373 : vector<2x256xf32>
    %cst_175 = arith.constant 0.000000e+00 : f32
    %375 = vector.shape_cast %75 : vector<1x256xi1> to vector<1x256xi1>
    %376 = vector.broadcast %375 : vector<1x256xi1> to vector<2x256xi1>
    %377 = vector.broadcast %cst_175 : f32 to vector<2x256xf32>
    %378 = arith.select %376, %374, %377 : vector<2x256xi1>, vector<2x256xf32>
    %379 = arith.addf %301, %378 : vector<2x256xf32>
    %380 = arith.addf %379, %340 : vector<2x256xf32>
    %cst_176 = arith.constant dense<0.000000e+00> : vector<256xf32>
    %381 = vector.multi_reduction <add>, %380, %cst_176 [0] : vector<2x256xf32> to vector<256xf32>
    %382 = vector.shape_cast %381 : vector<256xf32> to vector<1x256xf32>
    %383 = arith.negf %382 : vector<1x256xf32>
    %384 = math.exp %383 : vector<1x256xf32>
    %cst_177 = arith.constant 1.000000e+00 : f32
    %385 = vector.broadcast %cst_177 : f32 to vector<1x256xf32>
    %386 = arith.addf %385, %384 : vector<1x256xf32>
    %387 = arith.divf %385, %386 : vector<1x256xf32>
    %388 = vector.broadcast %387 : vector<1x256xf32> to vector<32x256xf32>
    %389 = arith.mulf %101, %388 : vector<32x256xf32>
    %c0_178 = arith.constant 0 : index
    %c0_179 = arith.constant 0 : index
    %c0_180 = arith.constant 0 : index
    %390 = vector.load %arg5[%c0_178, %c0_179, %c0_180] : memref<1x32x256xf32, #tpu.memory_space<vmem>>, vector<1x32x256xf32>
    %391 = vector.shape_cast %390 : vector<1x32x256xf32> to vector<32x256xf32>
    %392 = vector.shape_cast %389 : vector<32x256xf32> to vector<1x32x256xf32>
    tpu.vector_store %arg5[%c0_178, %c0_179, %c0_180], %392 {strides = array<i32>} : memref<1x32x256xf32, #tpu.memory_space<vmem>>, vector<1x32x256xf32>,
    return
  }
  func.func @transform_0(%arg0: i32) -> (i32, i32, i32) {
    %c0_i32 = arith.constant 0 : i32
    %c0_i32_0 = arith.constant 0 : i32
    %c0_i32_1 = arith.constant 0 : i32
    return %arg0, %c0_i32, %c0_i32_0 : i32, i32, i32
  }
  func.func @transform_1(%arg0: i32) -> (i32, i32) {
    %c0_i32 = arith.constant 0 : i32
    %c0_i32_0 = arith.constant 0 : i32
    %c0_i32_1 = arith.constant 0 : i32
    return %c0_i32, %c0_i32_0 : i32, i32
  }
  func.func @transform_2(%arg0: i32) -> (i32, i32) {
    %c0_i32 = arith.constant 0 : i32
    %c0_i32_0 = arith.constant 0 : i32
    %c0_i32_1 = arith.constant 0 : i32
    return %c0_i32, %c0_i32_0 : i32, i32
  }
  func.func @transform_3(%arg0: i32) -> (i32, i32) {
    %c0_i32 = arith.constant 0 : i32
    %c0_i32_0 = arith.constant 0 : i32
    %c0_i32_1 = arith.constant 0 : i32
    return %c0_i32, %c0_i32_0 : i32, i32
  }
  func.func @transform_4(%arg0: i32) -> (i32, i32, i32) {
    %c0_i32 = arith.constant 0 : i32
    %c0_i32_0 = arith.constant 0 : i32
    %c0_i32_1 = arith.constant 0 : i32
    return %arg0, %c0_i32, %c0_i32_0 : i32, i32, i32
  }
}

</mosaic_0001>

<llo_original>
// kernel: tpu_custom_call.1
$region0: #{tpu_custom_call.1}
  #allocation0 [shape = 'u32[]', space=smem, size = 0x4, offset = 0x4, fixed_abs, tag = 'smem constant byte address 0x4 - core index']
  #allocation1 [shape = 'u32[72,128]{1,0:T(1,128)}', space=vmem, size = 0x9000, scoped, tag = 'internal scratch']
  #allocation2 [shape = 'f32[2,358]{1,0:T(2,128)}', space=vmem, size = 0xc00, scoped, tag = 'scratch operand']
  %s0 = inlined_call_operand.hbm [shape: f32[2,32,256], index: 0, kind: input, shape index: {}]
  %s1 = inlined_call_operand.vmem [shape: f32[2,32], index: 1, kind: input, shape index: {}]
  %s2 = inlined_call_operand.vmem [shape: f32[32,2], index: 2, kind: input, shape index: {}]
  %s3 = inlined_call_operand.vmem [shape: f32[2,49], index: 3, kind: input, shape index: {}]
  %s4 = inlined_call_operand.hbm [shape: f32[2,32,256], index: 4, kind: output, shape index: {}]
  %s5 = sld [smem:[#allocation0]]
  $region53: #{tpu_custom_call.1} parent=0
    _
  %s7 = ssub.s32 1, %s5
  %s8 = scalar_select 0, %s7, %s5
  $region1: #{tpu_custom_call.1} parent=0
    #allocation3 [shape = 'u8[65536]{0}', space=vmem, size = 0x10000, scoped, tag = 'input window, operand 0']
    #allocation4 [shape = 's32[2]{0}', space=sflag, size = 0x8, scoped, tag = 'scoped memory for tpu_custom_call.1']
    #allocation5 [shape = 's32[2]{0}', space=sflag, size = 0x8, scoped, tag = 'scoped memory for tpu_custom_call.1']
    #allocation6 [shape = 'u8[65536]{0}', space=vmem, size = 0x10000, scoped, tag = 'output window, operand 0']
    %9 = vsyncpa [#allocation4], 0
    %s10 = scalar_lea.sflag [#allocation4], 1
    %11 = vsyncpa %s10, 0
    %12 = vsyncpa [#allocation5], 0
    %s13 = scalar_lea.sflag [#allocation5], 1
    %14 = vsyncpa %s13, 0
    loop: start=0, step=1, limit=4
    $region2: #{tpu_custom_call.1} parent=1 // loop_pre_header
      _
    $region3: #{tpu_custom_call.1} parent=1 // loop_header
      %s16 = sphi 0, %s20
      %p17 = scmp.ge.s32.totalorder %s16, 4
      %s26 = sphi 0, %s28
      %s29 = sphi 0, %s26
      %s30 = sphi 0, %s29
      %s46 = sphi 0, %s30
      %s50 = sphi 0, %s50
      %s52 = sphi 0, %s50
      %s53 = sphi 0, %s52
      %s67 = sphi 0, %s53
      %s71 = sphi 0, %s71
      %s73 = sphi 0, %s71
      %s74 = sphi 0, %s73
      %s88 = sphi 0, %s74
      %s92 = sphi 0, %s92
      %s94 = sphi 0, %s92
      %s95 = sphi 0, %s94
      %s109 = sphi 0, %s95
      %s115 = sphi 0, %s117
      %s118 = sphi 0, %s115
      %s119 = sphi 0, %s118
      %s135 = sphi 0, %s119
    $region4: #{tpu_custom_call.1} parent=1 // loop_header_branch
      %19 = sbr.rel (%p17) target = $region8
    $region5: #{tpu_custom_call.1} parent=1 // loop_body
      %s21 = ssub.s32 %s16, 1
      %s22 = ssub.s32 %s16, 2
      %s23 = sadd.s32 %s16, 1
      %s24 = ssub.s32 %s16, %s23
      %p25 = scmp.eq.s32.totalorder %s24, 0
      %s27 = sadd.s32 %s26, 1
      %s28 = scalar_select %p25, %s26, %s27
      %p31 = pneg %p25
      %p32 = scmp.eq.s32.totalorder %s16, 1
      %p33 = por %p31, %p32
      %p34 = scmp.ne.s32.totalorder %s26, %s29
      %p35 = scmp.eq.s32.totalorder %s16, 0
      %p36 = por %p34, %p35
      %p37 = scmp.ne.s32.totalorder %s26, %s29
      %p38 = scmp.eq.s32.totalorder %s21, 1
      %p39 = por %p37, %p38
      %p40 = scmp.ne.s32.totalorder %s29, %s30
      %p41 = scmp.eq.s32.totalorder %s21, 0
      %p42 = por %p40, %p41
      %p43 = scmp.ne.s32.totalorder %s29, %s30
      %p44 = scmp.eq.s32.totalorder %s22, 1
      %p45 = por %p43, %p44
      %p47 = scmp.ne.s32.totalorder %s30, %s46
      %p48 = scmp.eq.s32.totalorder %s22, 0
      %p49 = por %p47, %p48
      %s51 = sadd.s32 %s50, 1
      %p54 = scmp.eq.s32.totalorder %s16, 1
      %p55 = scmp.ne.s32.totalorder %s50, %s52
      %p56 = scmp.eq.s32.totalorder %s16, 0
      %p57 = por %p55, %p56
      %p58 = scmp.ne.s32.totalorder %s50, %s52
      %p59 = scmp.eq.s32.totalorder %s21, 1
      %p60 = por %p58, %p59
      %p61 = scmp.ne.s32.totalorder %s52, %s53
      %p62 = scmp.eq.s32.totalorder %s21, 0
      %p63 = por %p61, %p62
      %p64 = scmp.ne.s32.totalorder %s52, %s53
      %p65 = scmp.eq.s32.totalorder %s22, 1
      %p66 = por %p64, %p65
      %p68 = scmp.ne.s32.totalorder %s53, %s67
      %p69 = scmp.eq.s32.totalorder %s22, 0
      %p70 = por %p68, %p69
      %s72 = sadd.s32 %s71, 1
      %p75 = scmp.eq.s32.totalorder %s16, 1
      %p76 = scmp.ne.s32.totalorder %s71, %s73
      %p77 = scmp.eq.s32.totalorder %s16, 0
      %p78 = por %p76, %p77
      %p79 = scmp.ne.s32.totalorder %s71, %s73
      %p80 = scmp.eq.s32.totalorder %s21, 1
      %p81 = por %p79, %p80
      %p82 = scmp.ne.s32.totalorder %s73, %s74
      %p83 = scmp.eq.s32.totalorder %s21, 0
      %p84 = por %p82, %p83
      %p85 = scmp.ne.s32.totalorder %s73, %s74
      %p86 = scmp.eq.s32.totalorder %s22, 1
      %p87 = por %p85, %p86
      %p89 = scmp.ne.s32.totalorder %s74, %s88
      %p90 = scmp.eq.s32.totalorder %s22, 0
      %p91 = por %p89, %p90
      %s93 = sadd.s32 %s92, 1
      %p96 = scmp.eq.s32.totalorder %s16, 1
      %p97 = scmp.ne.s32.totalorder %s92, %s94
      %p98 = scmp.eq.s32.totalorder %s16, 0
      %p99 = por %p97, %p98
      %p100 = scmp.ne.s32.totalorder %s92, %s94
      %p101 = scmp.eq.s32.totalorder %s21, 1
      %p102 = por %p100, %p101
      %p103 = scmp.ne.s32.totalorder %s94, %s95
      %p104 = scmp.eq.s32.totalorder %s21, 0
      %p105 = por %p103, %p104
      %p106 = scmp.ne.s32.totalorder %s94, %s95
      %p107 = scmp.eq.s32.totalorder %s22, 1
      %p108 = por %p106, %p107
      %p110 = scmp.ne.s32.totalorder %s95, %s109
      %p111 = scmp.eq.s32.totalorder %s22, 0
      %p112 = por %p110, %p111
      %s113 = ssub.s32 %s16, %s23
      %p114 = scmp.eq.s32.totalorder %s113, 0
      %s116 = sadd.s32 %s115, 1
      %s117 = scalar_select %p114, %s115, %s116
      %p120 = pneg %p114
      %p121 = scmp.eq.s32.totalorder %s16, 1
      %p122 = por %p120, %p121
      %p123 = scmp.ne.s32.totalorder %s115, %s118
      %p124 = scmp.eq.s32.totalorder %s16, 0
      %p125 = por %p123, %p124
      %p126 = scmp.ne.s32.totalorder %s115, %s118
      %p127 = scmp.eq.s32.totalorder %s21, 1
      %p128 = por %p126, %p127
      %p129 = scmp.ne.s32.totalorder %s118, %s119
      %p130 = scmp.eq.s32.totalorder %s21, 0
      %p131 = por %p129, %p130
      %p132 = scmp.ne.s32.totalorder %s118, %s119
      %p133 = scmp.eq.s32.totalorder %s22, 1
      %p134 = por %p132, %p133
      %p136 = scmp.ne.s32.totalorder %s119, %s135
      %p137 = scmp.eq.s32.totalorder %s22, 0
      %p138 = por %p136, %p137
      %p139 = scmp.le.s32.totalorder 1, %s16
      %p140 = scmp.lt.s32.totalorder %s16, 3
      %p141 = pnand %p139, %p140
      %p142 = pneg %p141
      // Predicated region
      $region9: #{tpu_custom_call.1} parent=5 // pred_check
        _
      $region10: #{tpu_custom_call.1} parent=5 // pred_check_branch
        %144 = sbr.rel (%p141) target = $region12
      $region11: #{tpu_custom_call.1} parent=5 // pred_region
        %s145 = ssub.s32 %s16, 1
        // Predicated region
        $region13: #{tpu_custom_call.1} parent=11 // pred_check
          %p146 = pneg %p63
        $region14: #{tpu_custom_call.1} parent=11 // pred_check_branch
          %148 = sbr.rel (%p146) target = $region16
        $region15: #{tpu_custom_call.1} parent=11 // pred_region
          _
        $region16: #{tpu_custom_call.1} parent=11 // pred_fallthru
          _
        // Predicated region
        $region17: #{tpu_custom_call.1} parent=11 // pred_check
          %p149 = pneg %p84
        $region18: #{tpu_custom_call.1} parent=11 // pred_check_branch
          %151 = sbr.rel (%p149) target = $region20
        $region19: #{tpu_custom_call.1} parent=11 // pred_region
          _
        $region20: #{tpu_custom_call.1} parent=11 // pred_fallthru
          _
        // Predicated region
        $region21: #{tpu_custom_call.1} parent=11 // pred_check
          %p152 = pneg %p105
        $region22: #{tpu_custom_call.1} parent=11 // pred_check_branch
          %154 = sbr.rel (%p152) target = $region24
        $region23: #{tpu_custom_call.1} parent=11 // pred_region
          _
        $region24: #{tpu_custom_call.1} parent=11 // pred_fallthru
          _
      $region12: #{tpu_custom_call.1} parent=5 // pred_fallthru
        _
      %p155 = scmp.lt.s32.totalorder %s16, 2
      // Predicated region
      $region25: #{tpu_custom_call.1} parent=5 // pred_check
        %p156 = pneg %p155
      $region26: #{tpu_custom_call.1} parent=5 // pred_check_branch
        %158 = sbr.rel (%p156) target = $region28
      $region27: #{tpu_custom_call.1} parent=5 // pred_region
        // Predicated region
        $region29: #{tpu_custom_call.1} parent=27 // pred_check
          %p159 = pneg %p36
        $region30: #{tpu_custom_call.1} parent=27 // pred_check_branch
          %161 = sbr.rel (%p159) target = $region32
        $region31: #{tpu_custom_call.1} parent=27 // pred_region
          %s162 = sand.u32 %s26, 1
          %s163 = scalar_lea.sflag [#allocation4], %s162
          %s164 = sand.u32 %s26, 1
          %s165 = smul.addr %s164, 64
          %s166 = scalar_lea.vmem [#allocation3], %s165
          %168 = vsyncadd %s163, 0
          %s169 = smul.addr %s16, 8
          %s170 = smul.addr %s169, 8
          %s171 = scalar_lea.hbm %s0, %s170
          %s172 = sshll.u32 %s171, 4
          %s173 = int_to_ptr.hbm [resolvable:$true] %s172
          %s174 = sshll.u32 %s166, 4
          %s175 = int_to_ptr.vmem [resolvable:$true] %s174
          %180 = dma.hbm_to_vmem [thread:$0]  %s173, 1024, %s175, %s163, 256, 256, 16
        $region32: #{tpu_custom_call.1} parent=27 // pred_fallthru
          _
      $region28: #{tpu_custom_call.1} parent=5 // pred_fallthru
        _
      %p181 = scmp.le.s32.totalorder 1, %s16
      %p182 = scmp.lt.s32.totalorder %s16, 3
      %p183 = pnand %p181, %p182
      %p184 = pneg %p183
      // Predicated region
      $region33: #{tpu_custom_call.1} parent=5 // pred_check
        _
      $region34: #{tpu_custom_call.1} parent=5 // pred_check_branch
        %186 = sbr.rel (%p183) target = $region36
      $region35: #{tpu_custom_call.1} parent=5 // pred_region
        %s187 = ssub.s32 %s16, 1
        %s188 = sand.u32 %s29, 1
        %s189 = scalar_lea.sflag [#allocation4], %s188
        %s190 = sand.u32 %s29, 1
        %s191 = smul.addr %s190, 64
        %s192 = scalar_lea.vmem [#allocation3], %s191
        // Predicated region
        $region37: #{tpu_custom_call.1} parent=35 // pred_check
          %p193 = pneg %p42
        $region38: #{tpu_custom_call.1} parent=35 // pred_check_branch
          %195 = sbr.rel (%p193) target = $region40
        $region39: #{tpu_custom_call.1} parent=35 // pred_region
          %197 = dma.done %s189, 1024
        $region40: #{tpu_custom_call.1} parent=35 // pred_fallthru
          _
        %s198 = sand.u32 %s29, 1
        %s199 = scalar_lea.sflag [#allocation4], %s198
        %s200 = sand.u32 %s29, 1
        %s201 = smul.addr %s200, 64
        %s202 = scalar_lea.vmem [#allocation3], %s201
        %p203 = pneg %p42
        %p204 = pneg %p39
        %p205 = pneg %p63
        %p206 = pneg %p60
        %p207 = pneg %p84
        %p208 = pneg %p81
        %p209 = pneg %p105
        %p210 = pneg %p102
        %p211 = pneg %p131
        %p212 = pneg %p128
        %s213 = sand.u32 %s118, 1
        %s214 = scalar_lea.sflag [#allocation5], %s213
        %s215 = sand.u32 %s118, 1
        %s216 = smul.addr %s215, 64
        %s217 = scalar_lea.vmem [#allocation6], %s216
        %v218 = vld [vmem:[%s1] sm:$0x3]
        %v219 = vld [vmem:[%s2] sm:$0xff]
        %v220 = vld [vmem:[%s2 + $0x8] sm:$0xff]
        %v221 = vld [vmem:[%s2 + $0x10] sm:$0xff]
        %v222 = vld [vmem:[%s2 + $0x18] sm:$0xff]
        %v223 = vlaneseq
        %v224 = vand.u32 %v223, 127
        %v225 = vadd.s32 %v224, 128
        %vm226 = vcmp.lt.s32.totalorder %v224, 0
        %v227 = vsub.s32 0, %v224
        %v228 = vsel %vm226, %v227, %v224
        %v229 = vshrl.u32 %v228, 4
        %v230 = vand.u32 %v228, 15
        %v231 = vsub.s32 0, %v230
        %v232 = vsel %vm226, %v231, %v230
        %vm233 = vcmp.lt.s32.totalorder %v225, 0
        %v234 = vsub.s32 0, %v225
        %v235 = vsel %vm233, %v234, %v225
        %v236 = vshrl.u32 %v235, 4
        %v237 = vand.u32 %v235, 15
        %v238 = vsub.s32 0, %v237
        %v239 = vsel %vm233, %v238, %v237
        %vm240 = vcmp.ne.s32.totalorder %v232, 0
        %vm241 = vcmp.ne.s32.totalorder %v239, 0
        %vm242 = vcmp.lt.s32.totalorder %v232, 0
        %vm243 = vcmp.lt.s32.totalorder %v239, 0
        %vm244 = vmand %vm242, %vm240
        %vm245 = vmand %vm243, %vm241
        %v246 = vadd.s32 %v232, 16
        %v247 = vadd.s32 %v239, 16
        %v248 = vsel %vm244, %v246, %v232
        %v249 = vsel %vm245, %v247, %v239
        %v250 = vadd.s32 %v248, 4294967293
        %v251 = vadd.s32 %v249, 4294967293
        %vm252 = vcmp.ge.s32.totalorder %v250, 0
        %vm253 = vcmp.ge.s32.totalorder %v251, 0
        %vm254 = vcmp.lt.s32.totalorder %v250, 16
        %vm255 = vcmp.lt.s32.totalorder %v251, 16
        %vm256 = vmand %vm252, %vm254
        %vm257 = vmand %vm253, %vm255
        %v258 = vadd.s32 %v248, 4294967294
        %v259 = vadd.s32 %v249, 4294967294
        %vm260 = vcmp.ge.s32.totalorder %v258, 0
        %vm261 = vcmp.ge.s32.totalorder %v259, 0
        %vm262 = vcmp.lt.s32.totalorder %v258, 16
        %vm263 = vcmp.lt.s32.totalorder %v259, 16
        %vm264 = vmand %vm260, %vm262
        %vm265 = vmand %vm261, %vm263
        %v266 = vadd.s32 %v248, 4294967295
        %v267 = vadd.s32 %v249, 4294967295
        %vm268 = vcmp.ge.s32.totalorder %v266, 0
        %vm269 = vcmp.ge.s32.totalorder %v267, 0
        %vm270 = vcmp.lt.s32.totalorder %v266, 16
        %vm271 = vcmp.lt.s32.totalorder %v267, 16
        %vm272 = vmand %vm268, %vm270
        %vm273 = vmand %vm269, %vm271
        %v274 = vadd.s32 %v248, 1
        %v275 = vadd.s32 %v249, 1
        %vm276 = vcmp.ge.s32.totalorder %v274, 0
        %vm277 = vcmp.ge.s32.totalorder %v275, 0
        %vm278 = vcmp.lt.s32.totalorder %v274, 16
        %vm279 = vcmp.lt.s32.totalorder %v275, 16
        %vm280 = vmand %vm276, %vm278
        %vm281 = vmand %vm277, %vm279
        %v282 = vadd.s32 %v248, 2
        %v283 = vadd.s32 %v249, 2
        %vm284 = vcmp.ge.s32.totalorder %v282, 0
        %vm285 = vcmp.ge.s32.totalorder %v283, 0
        %vm286 = vcmp.lt.s32.totalorder %v282, 16
        %vm287 = vcmp.lt.s32.totalorder %v283, 16
        %vm288 = vmand %vm284, %vm286
        %vm289 = vmand %vm285, %vm287
        %v290 = vadd.s32 %v248, 3
        %v291 = vadd.s32 %v249, 3
        %vm292 = vcmp.ge.s32.totalorder %v290, 0
        %vm293 = vcmp.ge.s32.totalorder %v291, 0
        %vm294 = vcmp.lt.s32.totalorder %v290, 16
        %vm295 = vcmp.lt.s32.totalorder %v291, 16
        %vm296 = vmand %vm292, %vm294
        %vm297 = vmand %vm293, %vm295
        %v298 = vld [vmem:[%s192] sm:$0xff]
        %v299 = vld [vmem:[%s192 + $0x8] sm:$0xff]
        %v300 = vld [vmem:[%s192 + $0x10] sm:$0xff]
        %v301 = vld [vmem:[%s192 + $0x18] sm:$0xff]
        %v302 = vld [vmem:[%s192 + $0x20] sm:$0xff]
        %v303 = vld [vmem:[%s192 + $0x28] sm:$0xff]
        %v304 = vld [vmem:[%s192 + $0x30] sm:$0xff]
        %v305 = vld [vmem:[%s192 + $0x38] sm:$0xff]
        %306 = vmatpush.msra.mxu0 0.00390625
        %307 = vmatpush.msra.mxu0 0.00390625
        %308 = vmatpush.msra.mxu0 0.00390625
        %309 = vmatpush.msra.mxu0 0.00390625
        %310 = vmatpush.msra.mxu0 0.00390625
        %311 = vmatpush.msra.mxu0 0.00390625
        %312 = vmatpush.msra.mxu0 0.00390625
        %313 = vmatpush.msra.mxu0 0.00390625
        %314 = vmatpush.msra.mxu0 0.00390625
        %315 = vmatpush.msra.mxu0 0.00390625
        %316 = vmatpush.msra.mxu0 0.00390625
        %317 = vmatpush.msra.mxu0 0.00390625
        %318 = vmatpush.msra.mxu0 0.00390625
        %319 = vmatpush.msra.mxu0 0.00390625
        %320 = vmatpush.msra.mxu0 0.00390625
        %321 = vmatpush.msra.mxu0 0.00390625
        %322 = vmatmul.f32.gmra.mxu0 %v298
        %v323 = vpop.f32.mrf.mxu0
        %v324 = vadd.f32 0.0, %v323
        %325 = vmatmul.f32.gmra.mxu0 %v300
        %v326 = vpop.f32.mrf.mxu0
        %v327 = vadd.f32 0.0, %v326
        %328 = vmatmul.f32.gmra.mxu0 %v302
        %v329 = vpop.f32.mrf.mxu0
        %v330 = vadd.f32 0.0, %v329
        %331 = vmatmul.f32.gmra.mxu0 %v304
        %v332 = vpop.f32.mrf.mxu0
        %v333 = vadd.f32 0.0, %v332
        %334 = vdwg.mxu0
        %335 = vmatpush.msra.mxu0 0.00390625
        %336 = vmatpush.msra.mxu0 0.00390625
        %337 = vmatpush.msra.mxu0 0.00390625
        %338 = vmatpush.msra.mxu0 0.00390625
        %339 = vmatpush.msra.mxu0 0.00390625
        %340 = vmatpush.msra.mxu0 0.00390625
        %341 = vmatpush.msra.mxu0 0.00390625
        %342 = vmatpush.msra.mxu0 0.00390625
        %343 = vmatpush.msra.mxu0 0.00390625
        %344 = vmatpush.msra.mxu0 0.00390625
        %345 = vmatpush.msra.mxu0 0.00390625
        %346 = vmatpush.msra.mxu0 0.00390625
        %347 = vmatpush.msra.mxu0 0.00390625
        %348 = vmatpush.msra.mxu0 0.00390625
        %349 = vmatpush.msra.mxu0 0.00390625
        %350 = vmatpush.msra.mxu0 0.00390625
        %351 = vmatmul.f32.gmra.mxu0 %v299
        %v352 = vpop.f32.mrf.mxu0
        %v353 = vadd.f32 %v324, %v352
        %354 = vmatmul.f32.gmra.mxu0 %v301
        %v355 = vpop.f32.mrf.mxu0
        %v356 = vadd.f32 %v327, %v355
        %357 = vmatmul.f32.gmra.mxu0 %v303
        %v358 = vpop.f32.mrf.mxu0
        %v359 = vadd.f32 %v330, %v358
        %360 = vmatmul.f32.gmra.mxu0 %v305
        %v361 = vpop.f32.mrf.mxu0
        %v362 = vadd.f32 %v333, %v361
        %363 = vdwg.mxu0
        %v364 = vmax.f32 %v298, %v299
        %365 = vmax.xlane.f32.xlu0 %v364
        %v366 = vpop.xlane.xlu0 %365
        %v367 = vmax.f32 %v300, %v301
        %368 = vmax.xlane.f32.xlu0 %v367
        %v369 = vpop.xlane.xlu0 %368
        %v370 = vmax.f32 %v302, %v303
        %371 = vmax.xlane.f32.xlu0 %v370
        %v372 = vpop.xlane.xlu0 %371
        %v373 = vmax.f32 %v304, %v305
        %374 = vmax.xlane.f32.xlu0 %v373
        %v375 = vpop.xlane.xlu0 %374
        %vm376 = vcmp.eq.s32.totalorder %v224, 0
        %378 = vset.pattern.permute.xlu0 0
        %379 = vperm.xlu0 %378, %v353
        %v380 = vpop.permute.xlu0 %379
        %383 = vset.pattern.permute.xlu0 0
        %384 = vperm.xlu0 %383, %v356
        %v385 = vpop.permute.xlu0 %384
        %388 = vset.pattern.permute.xlu0 0
        %389 = vperm.xlu0 %388, %v359
        %v390 = vpop.permute.xlu0 %389
        %393 = vset.pattern.permute.xlu0 0
        %394 = vperm.xlu0 %393, %v362
        %v395 = vpop.permute.xlu0 %394
        %v397 = vsel %vm376, %v380, %v366
        %v398 = vsel %vm376, %v385, %v369
        %v399 = vsel %vm376, %v390, %v372
        %v400 = vsel %vm376, %v395, %v375
        %vm401 = vcmask 261120
        %v403 = vsel %vm401, %v218, 0
        %405 = vmatpush.msra.mxu0 0.0
        %406 = vmatpush.msra.mxu0 0.0
        %407 = vmatpush.msra.mxu0 0.0
        %408 = vmatpush.msra.mxu0 0.0
        %409 = vmatpush.msra.mxu0 0.0
        %410 = vmatpush.msra.mxu0 0.0
        %411 = vmatpush.msra.mxu0 0.0
        %412 = vmatpush.msra.mxu0 0.0
        %413 = vmatpush.msra.mxu0 0.0
        %414 = vmatpush.msra.mxu0 0.0
        %415 = vmatpush.msra.mxu0 0.0
        %416 = vmatpush.msra.mxu0 0.0
        %417 = vmatpush.msra.mxu0 %v400
        %418 = vmatpush.msra.mxu0 %v399
        %419 = vmatpush.msra.mxu0 %v398
        %420 = vmatpush.msra.mxu0 %v397
        %421 = vmatmul.f32.gmra.mxu0 %v403
        %v422 = vpop.f32.mrf.mxu0
        %v423 = vadd.f32 0.0, %v422
        %424 = vdwg.mxu0
        %v425 = vmax.f32 %v423, 0.0
        %vm426 = vcmask 15360
        %v428 = vsel %vm426, %v219, 0
        %v431 = vsel %vm426, %v220, 0
        %v434 = vsel %vm426, %v221, 0
        %v437 = vsel %vm426, %v222, 0
        %vm439 = vcmask 1041408
        %v441 = vsel %vm439, %v425, 0
        %443 = vmatpush.msra.mxu0 0.0
        %444 = vmatpush.msra.mxu0 0.0
        %445 = vmatpush.msra.mxu0 0.0
        %446 = vmatpush.msra.mxu0 0.0
        %447 = vmatpush.msra.mxu0 0.0
        %448 = vmatpush.msra.mxu0 0.0
        %449 = vmatpush.msra.mxu0 0.0
        %450 = vmatpush.msra.mxu0 0.0
        %451 = vmatpush.msra.mxu0 0.0
        %452 = vmatpush.msra.mxu0 0.0
        %453 = vmatpush.msra.mxu0 0.0
        %454 = vmatpush.msra.mxu0 0.0
        %455 = vmatpush.msra.mxu0 0.0
        %456 = vmatpush.msra.mxu0 0.0
        %457 = vmatpush.msra.mxu0 0.0
        %458 = vmatpush.msra.mxu0 %v441
        %459 = vmatmul.f32.gmra.mxu0 %v428
        %v460 = vpop.f32.mrf.mxu0
        %v461 = vadd.f32 0.0, %v460
        %462 = vmatmul.f32.gmra.mxu0 %v431
        %v463 = vpop.f32.mrf.mxu0
        %v464 = vadd.f32 0.0, %v463
        %465 = vmatmul.f32.gmra.mxu0 %v434
        %v466 = vpop.f32.mrf.mxu0
        %v467 = vadd.f32 0.0, %v466
        %468 = vmatmul.f32.gmra.mxu0 %v437
        %v469 = vpop.f32.mrf.mxu0
        %v470 = vadd.f32 0.0, %v469
        %471 = vdwg.mxu0
        %v472 = vsel %vm426, %v461, 0.0
        %473 = vadd.xlane.f32.xlu0 %v472
        %v474 = vpop.xlane.xlu0 %473
        %v475 = vsel %vm426, %v464, 0.0
        %476 = vadd.xlane.f32.xlu0 %v475
        %v477 = vpop.xlane.xlu0 %476
        %v478 = vsel %vm426, %v467, 0.0
        %479 = vadd.xlane.f32.xlu0 %v478
        %v480 = vpop.xlane.xlu0 %479
        %v481 = vsel %vm426, %v470, 0.0
        %482 = vadd.xlane.f32.xlu0 %v481
        %v483 = vpop.xlane.xlu0 %482
        %v484 = vxor.u32 %v474, 2147483648
        %v485 = vxor.u32 %v477, 2147483648
        %v486 = vxor.u32 %v480, 2147483648
        %v487 = vxor.u32 %v483, 2147483648
        %v488 = vmul.f32 %v484, 1.442695
        %v489 = vpow.pop %v488
        %v490 = vmul.f32 %v485, 1.442695
        %v491 = vpow.pop %v490
        %v492 = vmul.f32 %v486, 1.442695
        %v493 = vpow.pop %v492
        %v494 = vmul.f32 %v487, 1.442695
        %v495 = vpow.pop %v494
        %v496 = vadd.f32 %v489, 1.0
        %v497 = vadd.f32 %v491, 1.0
        %v498 = vadd.f32 %v493, 1.0
        %v499 = vadd.f32 %v495, 1.0
        %v500 = vrcp.pop %v496
        %v501 = vmul.f32 %v496, %v500
        %v502 = vsub.f32 1.0, %v501
        %v503 = vmul.f32 %v500, %v502
        %v504 = vadd.f32 %v500, %v503
        %vm505 = vweird.f32 %v496
        %vm506 = vweird.f32 %v500
        %vm507 = vmor %vm505, %vm506
        %v508 = vsel %vm507, %v500, %v504
        %v509 = vand.u32 2147483647, %v496
        %vm510 = vcmp.eq.f32.partialorder %v509, 8.507059e+37
        %v511 = vand.u32 %v496, 2147483648
        %v512 = vor.u32 1.1754944e-38, %v511
        %v513 = vsel %vm510, %v512, %v508
        %v514 = vmul.f32 1.0, %v513
        %v515 = vrcp.pop %v497
        %v516 = vmul.f32 %v497, %v515
        %v517 = vsub.f32 1.0, %v516
        %v518 = vmul.f32 %v515, %v517
        %v519 = vadd.f32 %v515, %v518
        %vm520 = vweird.f32 %v497
        %vm521 = vweird.f32 %v515
        %vm522 = vmor %vm520, %vm521
        %v523 = vsel %vm522, %v515, %v519
        %v524 = vand.u32 2147483647, %v497
        %vm525 = vcmp.eq.f32.partialorder %v524, 8.507059e+37
        %v526 = vand.u32 %v497, 2147483648
        %v527 = vor.u32 1.1754944e-38, %v526
        %v528 = vsel %vm525, %v527, %v523
        %v529 = vmul.f32 1.0, %v528
        %v530 = vrcp.pop %v498
        %v531 = vmul.f32 %v498, %v530
        %v532 = vsub.f32 1.0, %v531
        %v533 = vmul.f32 %v530, %v532
        %v534 = vadd.f32 %v530, %v533
        %vm535 = vweird.f32 %v498
        %vm536 = vweird.f32 %v530
        %vm537 = vmor %vm535, %vm536
        %v538 = vsel %vm537, %v530, %v534
        %v539 = vand.u32 2147483647, %v498
        %vm540 = vcmp.eq.f32.partialorder %v539, 8.507059e+37
        %v541 = vand.u32 %v498, 2147483648
        %v542 = vor.u32 1.1754944e-38, %v541
        %v543 = vsel %vm540, %v542, %v538
        %v544 = vmul.f32 1.0, %v543
        %v545 = vrcp.pop %v499
        %v546 = vmul.f32 %v499, %v545
        %v547 = vsub.f32 1.0, %v546
        %v548 = vmul.f32 %v545, %v547
        %v549 = vadd.f32 %v545, %v548
        %vm550 = vweird.f32 %v499
        %vm551 = vweird.f32 %v545
        %vm552 = vmor %vm550, %vm551
        %v553 = vsel %vm552, %v545, %v549
        %v554 = vand.u32 2147483647, %v499
        %vm555 = vcmp.eq.f32.partialorder %v554, 8.507059e+37
        %v556 = vand.u32 %v499, 2147483648
        %v557 = vor.u32 1.1754944e-38, %v556
        %v558 = vsel %vm555, %v557, %v553
        %v559 = vmul.f32 1.0, %v558
        %v560 = vmul.f32 %v298, %v514
        %v561 = vmul.f32 %v299, %v514
        %v562 = vmul.f32 %v300, %v529
        %v563 = vmul.f32 %v301, %v529
        %v564 = vmul.f32 %v302, %v544
        %v565 = vmul.f32 %v303, %v544
        %v566 = vmul.f32 %v304, %v559
        %v567 = vmul.f32 %v305, %v559
        %v569 = vsel %vm401, 0.03125, 0
        %571 = vmatpush.msra.mxu0 0.0
        %572 = vmatpush.msra.mxu0 0.0
        %573 = vmatpush.msra.mxu0 0.0
        %574 = vmatpush.msra.mxu0 0.0
        %575 = vmatpush.msra.mxu0 0.0
        %576 = vmatpush.msra.mxu0 0.0
        %577 = vmatpush.msra.mxu0 0.0
        %578 = vmatpush.msra.mxu0 0.0
        %579 = vmatpush.msra.mxu0 0.0
        %580 = vmatpush.msra.mxu0 0.0
        %581 = vmatpush.msra.mxu0 0.0
        %582 = vmatpush.msra.mxu0 0.0
        %583 = vmatpush.msra.mxu0 %v566
        %584 = vmatpush.msra.mxu0 %v564
        %585 = vmatpush.msra.mxu0 %v562
        %586 = vmatpush.msra.mxu0 %v560
        %587 = vmatmul.f32.gmra.mxu0 %v569
        %v588 = vpop.f32.mrf.mxu0
        %v589 = vadd.f32 0.0, %v588
        %590 = vdwg.mxu0
        %591 = vmatpush.msra.mxu0 0.0
        %592 = vmatpush.msra.mxu0 0.0
        %593 = vmatpush.msra.mxu0 0.0
        %594 = vmatpush.msra.mxu0 0.0
        %595 = vmatpush.msra.mxu0 0.0
        %596 = vmatpush.msra.mxu0 0.0
        %597 = vmatpush.msra.mxu0 0.0
        %598 = vmatpush.msra.mxu0 0.0
        %599 = vmatpush.msra.mxu0 0.0
        %600 = vmatpush.msra.mxu0 0.0
        %601 = vmatpush.msra.mxu0 0.0
        %602 = vmatpush.msra.mxu0 0.0
        %603 = vmatpush.msra.mxu0 %v567
        %604 = vmatpush.msra.mxu0 %v565
        %605 = vmatpush.msra.mxu0 %v563
        %606 = vmatpush.msra.mxu0 %v561
        %607 = vmatmul.f32.gmra.mxu0 %v569
        %v608 = vpop.f32.mrf.mxu0
        %v609 = vadd.f32 0.0, %v608
        %610 = vdwg.mxu0
        %v611 = vmax.f32 %v560, %v564
        %v612 = vmax.f32 %v562, %v566
        %v613 = vmax.f32 %v611, %v612
        %v614 = vrot.slane %v613, 4
        %v615 = vmax.f32 %v613, %v614
        %v616 = vrot.slane %v615, 2
        %v617 = vmax.f32 %v615, %v616
        %v618 = vrot.slane %v617, 1
        %v619 = vmax.f32 %v617, %v618
        %v620 = vmax.f32 %v561, %v565
        %v621 = vmax.f32 %v563, %v567
        %v622 = vmax.f32 %v620, %v621
        %v623 = vrot.slane %v622, 4
        %v624 = vmax.f32 %v622, %v623
        %v625 = vrot.slane %v624, 2
        %v626 = vmax.f32 %v624, %v625
        %v627 = vrot.slane %v626, 1
        %v628 = vmax.f32 %v626, %v627
        %vm629 = vcmask 410624
        %630 = vst.msk [vmem:[#allocation2] sm:$0x3] %vm629, 0.0
        %vm631 = vcmask 828824
        %632 = vst.msk [vmem:[#allocation2 + $0x4] sm:$0x3] %vm631, 0.0
        %v635 = vrot.slane %v609, 7
        %vm636 = vcmask 1040384
        %v637 = vsel %vm636, %v589, %v635
        %638 = vrot.lane.b32.xlu0 %v637, 51
        %v639 = vpop.permute.xlu0 %638
        %v640 = vrot.slane %v639, 7
        %vm641 = vcmask 416768
        %v642 = vsel %vm641, %v640, %v639
        %v644 = vlaneseq
        %vm645 = vcmp.ge.s32.totalorder %v644, 51
        %vm646 = vcmp.lt.s32.totalorder %v644, 307
        %vm647 = vmand %vm645, %vm646
        %648 = vst.msk [vmem:[#allocation2] ss:$2 sm:$0x7] %vm647, %v642
        %v651 = vrot.slane %v628, 7
        %v652 = vsel %vm636, %v619, %v651
        %653 = vrot.lane.b32.xlu0 %v652, 51
        %v654 = vpop.permute.xlu0 %653
        %v655 = vrot.slane %v654, 7
        %v656 = vsel %vm641, %v655, %v654
        %s658 = scalar_lea.vmem [#allocation2], 1
        %659 = vst.msk [vmem:[%s658] ss:$2 sm:$0x7] %vm647, %v656
        %v660 = vld [vmem:[#allocation2] sm:$0xf]
        %v661 = vld [vmem:[%s3] sm:$0x3]
        %663 = vset.pattern.permute.xlu0 0
        %664 = vperm.xlu0 %663, %v661
        %v665 = vpop.permute.xlu0 %664
        %v667 = vunpack.c.l.s4 269488144
        %v668 = vunpack.c.0.s8 %v667
        %v669 = vperm.slane %v665, %v668
        %v671 = vmul.f32 %v660, %v669
        %v672 = vld [vmem:[#allocation2] sm:$0x3f]
        %673 = vset.pattern.permute.xlu0 7
        %674 = vperm.xlu0 %673, %v661
        %v675 = vpop.permute.xlu0 %674
        %v677 = vunpack.c.l.s4 269488144
        %v678 = vunpack.c.0.s8 %v677
        %v679 = vperm.slane %v675, %v678
        %v681 = vmul.f32 %v672, %v679
        %683 = vrot.lane.b32.xlu0 %v681, 112
        %v684 = vpop.permute.xlu0 %683
        %v685 = vrot.slane %v684, 2
        %vm686 = vcmask 916480
        %v687 = vsel %vm686, %v684, %v685
        %v689 = vadd.f32 %v671, %v687
        %690 = vset.pattern.permute.xlu0 14
        %691 = vperm.xlu0 %690, %v661
        %v692 = vpop.permute.xlu0 %691
        %v694 = vunpack.c.l.s4 269488144
        %v695 = vunpack.c.0.s8 %v694
        %v696 = vperm.slane %v692, %v695
        %v698 = vmul.f32 %v672, %v696
        %700 = vrot.lane.b32.xlu0 %v698, 96
        %v701 = vpop.permute.xlu0 %700
        %v702 = vrot.slane %v701, 2
        %vm703 = vcmask 785408
        %v704 = vsel %vm703, %v701, %v702
        %v706 = vadd.f32 %v689, %v704
        %707 = vset.pattern.permute.xlu0 21
        %708 = vperm.xlu0 %707, %v661
        %v709 = vpop.permute.xlu0 %708
        %v711 = vunpack.c.l.s4 269488144
        %v712 = vunpack.c.0.s8 %v711
        %v713 = vperm.slane %v709, %v712
        %v715 = vmul.f32 %v672, %v713
        %717 = vrot.lane.b32.xlu0 %v715, 80
        %v718 = vpop.permute.xlu0 %717
        %v719 = vrot.slane %v718, 2
        %vm720 = vcmask 654336
        %v721 = vsel %vm720, %v718, %v719
        %v723 = vadd.f32 %v706, %v721
        %724 = vset.pattern.permute.xlu0 28
        %725 = vperm.xlu0 %724, %v661
        %v726 = vpop.permute.xlu0 %725
        %v728 = vunpack.c.l.s4 269488144
        %v729 = vunpack.c.0.s8 %v728
        %v730 = vperm.slane %v726, %v729
        %v732 = vmul.f32 %v672, %v730
        %734 = vrot.lane.b32.xlu0 %v732, 64
        %v735 = vpop.permute.xlu0 %734
        %v736 = vrot.slane %v735, 2
        %vm737 = vcmask 523264
        %v738 = vsel %vm737, %v735, %v736
        %v740 = vadd.f32 %v723, %v738
        %741 = vset.pattern.permute.xlu0 35
        %742 = vperm.xlu0 %741, %v661
        %v743 = vpop.permute.xlu0 %742
        %v745 = vunpack.c.l.s4 269488144
        %v746 = vunpack.c.0.s8 %v745
        %v747 = vperm.slane %v743, %v746
        %v749 = vmul.f32 %v672, %v747
        %751 = vrot.lane.b32.xlu0 %v749, 48
        %v752 = vpop.permute.xlu0 %751
        %v753 = vrot.slane %v752, 2
        %vm754 = vcmask 392192
        %v755 = vsel %vm754, %v752, %v753
        %v757 = vadd.f32 %v740, %v755
        %758 = vset.pattern.permute.xlu0 42
        %759 = vperm.xlu0 %758, %v661
        %v760 = vpop.permute.xlu0 %759
        %v762 = vunpack.c.l.s4 269488144
        %v763 = vunpack.c.0.s8 %v762
        %v764 = vperm.slane %v760, %v763
        %v766 = vmul.f32 %v672, %v764
        %768 = vrot.lane.b32.xlu0 %v766, 32
        %v769 = vpop.permute.xlu0 %768
        %v770 = vrot.slane %v769, 2
        %v771 = vsel %vm401, %v769, %v770
        %v773 = vadd.f32 %v757, %v771
        %v774 = vsel %vm256, 1, 0
        %v775 = vsel %vm257, 1, 0
        %vm776 = vcmp.eq.s32.totalorder %v774, 1
        %vm777 = vcmp.eq.s32.totalorder %v775, 1
        %779 = vst [vmem:[#allocation1] ss:$4 sm:$0xff] %v773
        %v780 = vld.sshfl [vmem:[#allocation1] sm:$0xff pattern:$0x73625140]
        %v781 = vld.sshfl [vmem:[#allocation1 + $0x8] sm:$0xff pattern:$0x73625140]
        %v784 = vsel %vm776, %v780, 0.0
        %v785 = vsel %vm777, %v781, 0.0
        %v786 = vadd.f32 %v784, 0.0
        %v787 = vadd.f32 %v785, 0.0
        %v788 = vld [vmem:[#allocation2] sm:$0x3f]
        %v789 = vld [vmem:[%s3] sm:$0x3]
        %791 = vset.pattern.permute.xlu0 1
        %792 = vperm.xlu0 %791, %v789
        %v793 = vpop.permute.xlu0 %792
        %v795 = vunpack.c.l.s4 269488144
        %v796 = vunpack.c.0.s8 %v795
        %v797 = vperm.slane %v793, %v796
        %v799 = vmul.f32 %v788, %v797
        %800 = vset.pattern.permute.xlu0 8
        %801 = vperm.xlu0 %800, %v789
        %v802 = vpop.permute.xlu0 %801
        %v804 = vunpack.c.l.s4 269488144
        %v805 = vunpack.c.0.s8 %v804
        %v806 = vperm.slane %v802, %v805
        %v808 = vmul.f32 %v788, %v806
        %810 = vrot.lane.b32.xlu0 %v808, 112
        %v811 = vpop.permute.xlu0 %810
        %v812 = vrot.slane %v811, 2
        %v813 = vsel %vm686, %v811, %v812
        %v815 = vadd.f32 %v799, %v813
        %816 = vset.pattern.permute.xlu0 15
        %817 = vperm.xlu0 %816, %v789
        %v818 = vpop.permute.xlu0 %817
        %v820 = vunpack.c.l.s4 269488144
        %v821 = vunpack.c.0.s8 %v820
        %v822 = vperm.slane %v818, %v821
        %v824 = vmul.f32 %v788, %v822
        %826 = vrot.lane.b32.xlu0 %v824, 96
        %v827 = vpop.permute.xlu0 %826
        %v828 = vrot.slane %v827, 2
        %v829 = vsel %vm703, %v827, %v828
        %v831 = vadd.f32 %v815, %v829
        %832 = vset.pattern.permute.xlu0 22
        %833 = vperm.xlu0 %832, %v789
        %v834 = vpop.permute.xlu0 %833
        %v836 = vunpack.c.l.s4 269488144
        %v837 = vunpack.c.0.s8 %v836
        %v838 = vperm.slane %v834, %v837
        %v840 = vmul.f32 %v788, %v838
        %842 = vrot.lane.b32.xlu0 %v840, 80
        %v843 = vpop.permute.xlu0 %842
        %v844 = vrot.slane %v843, 2
        %v845 = vsel %vm720, %v843, %v844
        %v847 = vadd.f32 %v831, %v845
        %848 = vset.pattern.permute.xlu0 29
        %849 = vperm.xlu0 %848, %v789
        %v850 = vpop.permute.xlu0 %849
        %v852 = vunpack.c.l.s4 269488144
        %v853 = vunpack.c.0.s8 %v852
        %v854 = vperm.slane %v850, %v853
        %v856 = vmul.f32 %v788, %v854
        %858 = vrot.lane.b32.xlu0 %v856, 64
        %v859 = vpop.permute.xlu0 %858
        %v860 = vrot.slane %v859, 2
        %v861 = vsel %vm737, %v859, %v860
        %v863 = vadd.f32 %v847, %v861
        %864 = vset.pattern.permute.xlu0 36
        %865 = vperm.xlu0 %864, %v789
        %v866 = vpop.permute.xlu0 %865
        %v868 = vunpack.c.l.s4 269488144
        %v869 = vunpack.c.0.s8 %v868
        %v870 = vperm.slane %v866, %v869
        %v872 = vmul.f32 %v788, %v870
        %874 = vrot.lane.b32.xlu0 %v872, 48
        %v875 = vpop.permute.xlu0 %874
        %v876 = vrot.slane %v875, 2
        %v877 = vsel %vm754, %v875, %v876
        %v879 = vadd.f32 %v863, %v877
        %880 = vset.pattern.permute.xlu0 43
        %881 = vperm.xlu0 %880, %v789
        %v882 = vpop.permute.xlu0 %881
        %v884 = vunpack.c.l.s4 269488144
        %v885 = vunpack.c.0.s8 %v884
        %v886 = vperm.slane %v882, %v885
        %v888 = vmul.f32 %v788, %v886
        %890 = vrot.lane.b32.xlu0 %v888, 32
        %v891 = vpop.permute.xlu0 %890
        %v892 = vrot.slane %v891, 2
        %v893 = vsel %vm401, %v891, %v892
        %v895 = vadd.f32 %v879, %v893
        %v896 = vsel %vm264, 1, 0
        %v897 = vsel %vm265, 1, 0
        %vm898 = vcmp.eq.s32.totalorder %v896, 1
        %vm899 = vcmp.eq.s32.totalorder %v897, 1
        %901 = vst [vmem:[#allocation1] ss:$4 sm:$0xff] %v895
        %v902 = vld.sshfl [vmem:[#allocation1] sm:$0xff pattern:$0x73625140]
        %v903 = vld.sshfl [vmem:[#allocation1 + $0x8] sm:$0xff pattern:$0x73625140]
        %v904 = vld.sshfl [vmem:[#allocation1 + $0x10] sm:$0xff pattern:$0x73625140]
        %905 = vrot.lane.b32.xlu0 %v902, 127
        %v906 = vpop.permute.xlu0 %905
        %907 = vrot.lane.b32.xlu0 %v903, 127
        %v908 = vpop.permute.xlu0 %907
        %909 = vrot.lane.b32.xlu0 %v904, 127
        %v910 = vpop.permute.xlu0 %909
        %vm911 = vcmask 1039360
        %v912 = vsel %vm911, %v906, %v908
        %v913 = vsel %vm911, %v908, %v910
        %v916 = vsel %vm898, %v912, 0.0
        %v917 = vsel %vm899, %v913, 0.0
        %v918 = vadd.f32 %v916, 0.0
        %v919 = vadd.f32 %v917, 0.0
        %v920 = vld [vmem:[#allocation2] sm:$0x3f]
        %v921 = vld [vmem:[%s3] sm:$0x3]
        %923 = vset.pattern.permute.xlu0 2
        %924 = vperm.xlu0 %923, %v921
        %v925 = vpop.permute.xlu0 %924
        %v927 = vunpack.c.l.s4 269488144
        %v928 = vunpack.c.0.s8 %v927
        %v929 = vperm.slane %v925, %v928
        %v931 = vmul.f32 %v920, %v929
        %932 = vset.pattern.permute.xlu0 9
        %933 = vperm.xlu0 %932, %v921
        %v934 = vpop.permute.xlu0 %933
        %v936 = vunpack.c.l.s4 269488144
        %v937 = vunpack.c.0.s8 %v936
        %v938 = vperm.slane %v934, %v937
        %v940 = vmul.f32 %v920, %v938
        %942 = vrot.lane.b32.xlu0 %v940, 112
        %v943 = vpop.permute.xlu0 %942
        %v944 = vrot.slane %v943, 2
        %v945 = vsel %vm686, %v943, %v944
        %v947 = vadd.f32 %v931, %v945
        %948 = vset.pattern.permute.xlu0 16
        %949 = vperm.xlu0 %948, %v921
        %v950 = vpop.permute.xlu0 %949
        %v952 = vunpack.c.l.s4 269488144
        %v953 = vunpack.c.0.s8 %v952
        %v954 = vperm.slane %v950, %v953
        %v956 = vmul.f32 %v920, %v954
        %958 = vrot.lane.b32.xlu0 %v956, 96
        %v959 = vpop.permute.xlu0 %958
        %v960 = vrot.slane %v959, 2
        %v961 = vsel %vm703, %v959, %v960
        %v963 = vadd.f32 %v947, %v961
        %964 = vset.pattern.permute.xlu0 23
        %965 = vperm.xlu0 %964, %v921
        %v966 = vpop.permute.xlu0 %965
        %v968 = vunpack.c.l.s4 269488144
        %v969 = vunpack.c.0.s8 %v968
        %v970 = vperm.slane %v966, %v969
        %v972 = vmul.f32 %v920, %v970
        %974 = vrot.lane.b32.xlu0 %v972, 80
        %v975 = vpop.permute.xlu0 %974
        %v976 = vrot.slane %v975, 2
        %v977 = vsel %vm720, %v975, %v976
        %v979 = vadd.f32 %v963, %v977
        %980 = vset.pattern.permute.xlu0 30
        %981 = vperm.xlu0 %980, %v921
        %v982 = vpop.permute.xlu0 %981
        %v984 = vunpack.c.l.s4 269488144
        %v985 = vunpack.c.0.s8 %v984
        %v986 = vperm.slane %v982, %v985
        %v988 = vmul.f32 %v920, %v986
        %990 = vrot.lane.b32.xlu0 %v988, 64
        %v991 = vpop.permute.xlu0 %990
        %v992 = vrot.slane %v991, 2
        %v993 = vsel %vm737, %v991, %v992
        %v995 = vadd.f32 %v979, %v993
        %996 = vset.pattern.permute.xlu0 37
        %997 = vperm.xlu0 %996, %v921
        %v998 = vpop.permute.xlu0 %997
        %v1000 = vunpack.c.l.s4 269488144
        %v1001 = vunpack.c.0.s8 %v1000
        %v1002 = vperm.slane %v998, %v1001
        %v1004 = vmul.f32 %v920, %v1002
        %1006 = vrot.lane.b32.xlu0 %v1004, 48
        %v1007 = vpop.permute.xlu0 %1006
        %v1008 = vrot.slane %v1007, 2
        %v1009 = vsel %vm754, %v1007, %v1008
        %v1011 = vadd.f32 %v995, %v1009
        %1012 = vset.pattern.permute.xlu0 44
        %1013 = vperm.xlu0 %1012, %v921
        %v1014 = vpop.permute.xlu0 %1013
        %v1016 = vunpack.c.l.s4 269488144
        %v1017 = vunpack.c.0.s8 %v1016
        %v1018 = vperm.slane %v1014, %v1017
        %v1020 = vmul.f32 %v920, %v1018
        %1022 = vrot.lane.b32.xlu0 %v1020, 32
        %v1023 = vpop.permute.xlu0 %1022
        %v1024 = vrot.slane %v1023, 2
        %v1025 = vsel %vm401, %v1023, %v1024
        %v1027 = vadd.f32 %v1011, %v1025
        %v1028 = vsel %vm272, 1, 0
        %v1029 = vsel %vm273, 1, 0
        %vm1030 = vcmp.eq.s32.totalorder %v1028, 1
        %vm1031 = vcmp.eq.s32.totalorder %v1029, 1
        %1033 = vst [vmem:[#allocation1] ss:$4 sm:$0xff] %v1027
        %v1034 = vld.sshfl [vmem:[#allocation1] sm:$0xff pattern:$0x73625140]
        %v1035 = vld.sshfl [vmem:[#allocation1 + $0x8] sm:$0xff pattern:$0x73625140]
        %v1036 = vld.sshfl [vmem:[#allocation1 + $0x10] sm:$0xff pattern:$0x73625140]
        %1037 = vrot.lane.b32.xlu0 %v1034, 126
        %v1038 = vpop.permute.xlu0 %1037
        %1039 = vrot.lane.b32.xlu0 %v1035, 126
        %v1040 = vpop.permute.xlu0 %1039
        %1041 = vrot.lane.b32.xlu0 %v1036, 126
        %v1042 = vpop.permute.xlu0 %1041
        %vm1043 = vcmask 1031168
        %v1044 = vsel %vm1043, %v1038, %v1040
        %v1045 = vsel %vm1043, %v1040, %v1042
        %v1048 = vsel %vm1030, %v1044, 0.0
        %v1049 = vsel %vm1031, %v1045, 0.0
        %v1050 = vadd.f32 %v786, %v1048
        %v1051 = vadd.f32 %v787, %v1049
        %v1052 = vld [vmem:[#allocation2] sm:$0x3f]
        %v1053 = vld [vmem:[%s3] sm:$0x3]
        %1055 = vset.pattern.permute.xlu0 3
        %1056 = vperm.xlu0 %1055, %v1053
        %v1057 = vpop.permute.xlu0 %1056
        %v1059 = vunpack.c.l.s4 269488144
        %v1060 = vunpack.c.0.s8 %v1059
        %v1061 = vperm.slane %v1057, %v1060
        %v1063 = vmul.f32 %v1052, %v1061
        %1064 = vset.pattern.permute.xlu0 10
        %1065 = vperm.xlu0 %1064, %v1053
        %v1066 = vpop.permute.xlu0 %1065
        %v1068 = vunpack.c.l.s4 269488144
        %v1069 = vunpack.c.0.s8 %v1068
        %v1070 = vperm.slane %v1066, %v1069
        %v1072 = vmul.f32 %v1052, %v1070
        %1074 = vrot.lane.b32.xlu0 %v1072, 112
        %v1075 = vpop.permute.xlu0 %1074
        %v1076 = vrot.slane %v1075, 2
        %v1077 = vsel %vm686, %v1075, %v1076
        %v1079 = vadd.f32 %v1063, %v1077
        %1080 = vset.pattern.permute.xlu0 17
        %1081 = vperm.xlu0 %1080, %v1053
        %v1082 = vpop.permute.xlu0 %1081
        %v1084 = vunpack.c.l.s4 269488144
        %v1085 = vunpack.c.0.s8 %v1084
        %v1086 = vperm.slane %v1082, %v1085
        %v1088 = vmul.f32 %v1052, %v1086
        %1090 = vrot.lane.b32.xlu0 %v1088, 96
        %v1091 = vpop.permute.xlu0 %1090
        %v1092 = vrot.slane %v1091, 2
        %v1093 = vsel %vm703, %v1091, %v1092
        %v1095 = vadd.f32 %v1079, %v1093
        %1096 = vset.pattern.permute.xlu0 24
        %1097 = vperm.xlu0 %1096, %v1053
        %v1098 = vpop.permute.xlu0 %1097
        %v1100 = vunpack.c.l.s4 269488144
        %v1101 = vunpack.c.0.s8 %v1100
        %v1102 = vperm.slane %v1098, %v1101
        %v1104 = vmul.f32 %v1052, %v1102
        %1106 = vrot.lane.b32.xlu0 %v1104, 80
        %v1107 = vpop.permute.xlu0 %1106
        %v1108 = vrot.slane %v1107, 2
        %v1109 = vsel %vm720, %v1107, %v1108
        %v1111 = vadd.f32 %v1095, %v1109
        %1112 = vset.pattern.permute.xlu0 31
        %1113 = vperm.xlu0 %1112, %v1053
        %v1114 = vpop.permute.xlu0 %1113
        %v1116 = vunpack.c.l.s4 269488144
        %v1117 = vunpack.c.0.s8 %v1116
        %v1118 = vperm.slane %v1114, %v1117
        %v1120 = vmul.f32 %v1052, %v1118
        %1122 = vrot.lane.b32.xlu0 %v1120, 64
        %v1123 = vpop.permute.xlu0 %1122
        %v1124 = vrot.slane %v1123, 2
        %v1125 = vsel %vm737, %v1123, %v1124
        %v1127 = vadd.f32 %v1111, %v1125
        %1128 = vset.pattern.permute.xlu0 38
        %1129 = vperm.xlu0 %1128, %v1053
        %v1130 = vpop.permute.xlu0 %1129
        %v1132 = vunpack.c.l.s4 269488144
        %v1133 = vunpack.c.0.s8 %v1132
        %v1134 = vperm.slane %v1130, %v1133
        %v1136 = vmul.f32 %v1052, %v1134
        %1138 = vrot.lane.b32.xlu0 %v1136, 48
        %v1139 = vpop.permute.xlu0 %1138
        %v1140 = vrot.slane %v1139, 2
        %v1141 = vsel %vm754, %v1139, %v1140
        %v1143 = vadd.f32 %v1127, %v1141
        %1144 = vset.pattern.permute.xlu0 45
        %1145 = vperm.xlu0 %1144, %v1053
        %v1146 = vpop.permute.xlu0 %1145
        %v1148 = vunpack.c.l.s4 269488144
        %v1149 = vunpack.c.0.s8 %v1148
        %v1150 = vperm.slane %v1146, %v1149
        %v1152 = vmul.f32 %v1052, %v1150
        %1154 = vrot.lane.b32.xlu0 %v1152, 32
        %v1155 = vpop.permute.xlu0 %1154
        %v1156 = vrot.slane %v1155, 2
        %v1157 = vsel %vm401, %v1155, %v1156
        %v1159 = vadd.f32 %v1143, %v1157
        %1161 = vst [vmem:[#allocation1] ss:$4 sm:$0xff] %v1159
        %v1162 = vld.sshfl [vmem:[#allocation1] sm:$0xff pattern:$0x73625140]
        %v1163 = vld.sshfl [vmem:[#allocation1 + $0x8] sm:$0xff pattern:$0x73625140]
        %v1164 = vld.sshfl [vmem:[#allocation1 + $0x10] sm:$0xff pattern:$0x73625140]
        %1165 = vrot.lane.b32.xlu0 %v1162, 125
        %v1166 = vpop.permute.xlu0 %1165
        %1167 = vrot.lane.b32.xlu0 %v1163, 125
        %v1168 = vpop.permute.xlu0 %1167
        %1169 = vrot.lane.b32.xlu0 %v1164, 125
        %v1170 = vpop.permute.xlu0 %1169
        %vm1171 = vcmask 1022976
        %v1172 = vsel %vm1171, %v1166, %v1168
        %v1173 = vsel %vm1171, %v1168, %v1170
        %v1176 = vadd.f32 %v918, %v1172
        %v1177 = vadd.f32 %v919, %v1173
        %v1178 = vld [vmem:[#allocation2] sm:$0x3f]
        %v1179 = vld [vmem:[%s3] sm:$0x3]
        %1181 = vset.pattern.permute.xlu0 4
        %1182 = vperm.xlu0 %1181, %v1179
        %v1183 = vpop.permute.xlu0 %1182
        %v1185 = vunpack.c.l.s4 269488144
        %v1186 = vunpack.c.0.s8 %v1185
        %v1187 = vperm.slane %v1183, %v1186
        %v1189 = vmul.f32 %v1178, %v1187
        %1190 = vset.pattern.permute.xlu0 11
        %1191 = vperm.xlu0 %1190, %v1179
        %v1192 = vpop.permute.xlu0 %1191
        %v1194 = vunpack.c.l.s4 269488144
        %v1195 = vunpack.c.0.s8 %v1194
        %v1196 = vperm.slane %v1192, %v1195
        %v1198 = vmul.f32 %v1178, %v1196
        %1200 = vrot.lane.b32.xlu0 %v1198, 112
        %v1201 = vpop.permute.xlu0 %1200
        %v1202 = vrot.slane %v1201, 2
        %v1203 = vsel %vm686, %v1201, %v1202
        %v1205 = vadd.f32 %v1189, %v1203
        %1206 = vset.pattern.permute.xlu0 18
        %1207 = vperm.xlu0 %1206, %v1179
        %v1208 = vpop.permute.xlu0 %1207
        %v1210 = vunpack.c.l.s4 269488144
        %v1211 = vunpack.c.0.s8 %v1210
        %v1212 = vperm.slane %v1208, %v1211
        %v1214 = vmul.f32 %v1178, %v1212
        %1216 = vrot.lane.b32.xlu0 %v1214, 96
        %v1217 = vpop.permute.xlu0 %1216
        %v1218 = vrot.slane %v1217, 2
        %v1219 = vsel %vm703, %v1217, %v1218
        %v1221 = vadd.f32 %v1205, %v1219
        %1222 = vset.pattern.permute.xlu0 25
        %1223 = vperm.xlu0 %1222, %v1179
        %v1224 = vpop.permute.xlu0 %1223
        %v1226 = vunpack.c.l.s4 269488144
        %v1227 = vunpack.c.0.s8 %v1226
        %v1228 = vperm.slane %v1224, %v1227
        %v1230 = vmul.f32 %v1178, %v1228
        %1232 = vrot.lane.b32.xlu0 %v1230, 80
        %v1233 = vpop.permute.xlu0 %1232
        %v1234 = vrot.slane %v1233, 2
        %v1235 = vsel %vm720, %v1233, %v1234
        %v1237 = vadd.f32 %v1221, %v1235
        %1238 = vset.pattern.permute.xlu0 32
        %1239 = vperm.xlu0 %1238, %v1179
        %v1240 = vpop.permute.xlu0 %1239
        %v1242 = vunpack.c.l.s4 269488144
        %v1243 = vunpack.c.0.s8 %v1242
        %v1244 = vperm.slane %v1240, %v1243
        %v1246 = vmul.f32 %v1178, %v1244
        %1248 = vrot.lane.b32.xlu0 %v1246, 64
        %v1249 = vpop.permute.xlu0 %1248
        %v1250 = vrot.slane %v1249, 2
        %v1251 = vsel %vm737, %v1249, %v1250
        %v1253 = vadd.f32 %v1237, %v1251
        %1254 = vset.pattern.permute.xlu0 39
        %1255 = vperm.xlu0 %1254, %v1179
        %v1256 = vpop.permute.xlu0 %1255
        %v1258 = vunpack.c.l.s4 269488144
        %v1259 = vunpack.c.0.s8 %v1258
        %v1260 = vperm.slane %v1256, %v1259
        %v1262 = vmul.f32 %v1178, %v1260
        %1264 = vrot.lane.b32.xlu0 %v1262, 48
        %v1265 = vpop.permute.xlu0 %1264
        %v1266 = vrot.slane %v1265, 2
        %v1267 = vsel %vm754, %v1265, %v1266
        %v1269 = vadd.f32 %v1253, %v1267
        %1270 = vset.pattern.permute.xlu0 46
        %1271 = vperm.xlu0 %1270, %v1179
        %v1272 = vpop.permute.xlu0 %1271
        %v1274 = vunpack.c.l.s4 269488144
        %v1275 = vunpack.c.0.s8 %v1274
        %v1276 = vperm.slane %v1272, %v1275
        %v1278 = vmul.f32 %v1178, %v1276
        %1280 = vrot.lane.b32.xlu0 %v1278, 32
        %v1281 = vpop.permute.xlu0 %1280
        %v1282 = vrot.slane %v1281, 2
        %v1283 = vsel %vm401, %v1281, %v1282
        %v1285 = vadd.f32 %v1269, %v1283
        %v1286 = vsel %vm280, 1, 0
        %v1287 = vsel %vm281, 1, 0
        %vm1288 = vcmp.eq.s32.totalorder %v1286, 1
        %vm1289 = vcmp.eq.s32.totalorder %v1287, 1
        %1291 = vst [vmem:[#allocation1] ss:$4 sm:$0xff] %v1285
        %v1292 = vld.sshfl [vmem:[#allocation1] sm:$0xff pattern:$0x73625140]
        %v1293 = vld.sshfl [vmem:[#allocation1 + $0x8] sm:$0xff pattern:$0x73625140]
        %v1294 = vld.sshfl [vmem:[#allocation1 + $0x10] sm:$0xff pattern:$0x73625140]
        %1295 = vrot.lane.b32.xlu0 %v1292, 124
        %v1296 = vpop.permute.xlu0 %1295
        %1297 = vrot.lane.b32.xlu0 %v1293, 124
        %v1298 = vpop.permute.xlu0 %1297
        %1299 = vrot.lane.b32.xlu0 %v1294, 124
        %v1300 = vpop.permute.xlu0 %1299
        %vm1301 = vcmask 1014784
        %v1302 = vsel %vm1301, %v1296, %v1298
        %v1303 = vsel %vm1301, %v1298, %v1300
        %v1306 = vsel %vm1288, %v1302, 0.0
        %v1307 = vsel %vm1289, %v1303, 0.0
        %v1308 = vadd.f32 %v1050, %v1306
        %v1309 = vadd.f32 %v1051, %v1307
        %v1310 = vld [vmem:[#allocation2] sm:$0x3f]
        %v1311 = vld [vmem:[%s3] sm:$0x3]
        %1313 = vset.pattern.permute.xlu0 5
        %1314 = vperm.xlu0 %1313, %v1311
        %v1315 = vpop.permute.xlu0 %1314
        %v1317 = vunpack.c.l.s4 269488144
        %v1318 = vunpack.c.0.s8 %v1317
        %v1319 = vperm.slane %v1315, %v1318
        %v1321 = vmul.f32 %v1310, %v1319
        %1322 = vset.pattern.permute.xlu0 12
        %1323 = vperm.xlu0 %1322, %v1311
        %v1324 = vpop.permute.xlu0 %1323
        %v1326 = vunpack.c.l.s4 269488144
        %v1327 = vunpack.c.0.s8 %v1326
        %v1328 = vperm.slane %v1324, %v1327
        %v1330 = vmul.f32 %v1310, %v1328
        %1332 = vrot.lane.b32.xlu0 %v1330, 112
        %v1333 = vpop.permute.xlu0 %1332
        %v1334 = vrot.slane %v1333, 2
        %v1335 = vsel %vm686, %v1333, %v1334
        %v1337 = vadd.f32 %v1321, %v1335
        %1338 = vset.pattern.permute.xlu0 19
        %1339 = vperm.xlu0 %1338, %v1311
        %v1340 = vpop.permute.xlu0 %1339
        %v1342 = vunpack.c.l.s4 269488144
        %v1343 = vunpack.c.0.s8 %v1342
        %v1344 = vperm.slane %v1340, %v1343
        %v1346 = vmul.f32 %v1310, %v1344
        %1348 = vrot.lane.b32.xlu0 %v1346, 96
        %v1349 = vpop.permute.xlu0 %1348
        %v1350 = vrot.slane %v1349, 2
        %v1351 = vsel %vm703, %v1349, %v1350
        %v1353 = vadd.f32 %v1337, %v1351
        %1354 = vset.pattern.permute.xlu0 26
        %1355 = vperm.xlu0 %1354, %v1311
        %v1356 = vpop.permute.xlu0 %1355
        %v1358 = vunpack.c.l.s4 269488144
        %v1359 = vunpack.c.0.s8 %v1358
        %v1360 = vperm.slane %v1356, %v1359
        %v1362 = vmul.f32 %v1310, %v1360
        %1364 = vrot.lane.b32.xlu0 %v1362, 80
        %v1365 = vpop.permute.xlu0 %1364
        %v1366 = vrot.slane %v1365, 2
        %v1367 = vsel %vm720, %v1365, %v1366
        %v1369 = vadd.f32 %v1353, %v1367
        %1370 = vset.pattern.permute.xlu0 33
        %1371 = vperm.xlu0 %1370, %v1311
        %v1372 = vpop.permute.xlu0 %1371
        %v1374 = vunpack.c.l.s4 269488144
        %v1375 = vunpack.c.0.s8 %v1374
        %v1376 = vperm.slane %v1372, %v1375
        %v1378 = vmul.f32 %v1310, %v1376
        %1380 = vrot.lane.b32.xlu0 %v1378, 64
        %v1381 = vpop.permute.xlu0 %1380
        %v1382 = vrot.slane %v1381, 2
        %v1383 = vsel %vm737, %v1381, %v1382
        %v1385 = vadd.f32 %v1369, %v1383
        %1386 = vset.pattern.permute.xlu0 40
        %1387 = vperm.xlu0 %1386, %v1311
        %v1388 = vpop.permute.xlu0 %1387
        %v1390 = vunpack.c.l.s4 269488144
        %v1391 = vunpack.c.0.s8 %v1390
        %v1392 = vperm.slane %v1388, %v1391
        %v1394 = vmul.f32 %v1310, %v1392
        %1396 = vrot.lane.b32.xlu0 %v1394, 48
        %v1397 = vpop.permute.xlu0 %1396
        %v1398 = vrot.slane %v1397, 2
        %v1399 = vsel %vm754, %v1397, %v1398
        %v1401 = vadd.f32 %v1385, %v1399
        %1402 = vset.pattern.permute.xlu0 47
        %1403 = vperm.xlu0 %1402, %v1311
        %v1404 = vpop.permute.xlu0 %1403
        %v1406 = vunpack.c.l.s4 269488144
        %v1407 = vunpack.c.0.s8 %v1406
        %v1408 = vperm.slane %v1404, %v1407
        %v1410 = vmul.f32 %v1310, %v1408
        %1412 = vrot.lane.b32.xlu0 %v1410, 32
        %v1413 = vpop.permute.xlu0 %1412
        %v1414 = vrot.slane %v1413, 2
        %v1415 = vsel %vm401, %v1413, %v1414
        %v1417 = vadd.f32 %v1401, %v1415
        %v1418 = vsel %vm288, 1, 0
        %v1419 = vsel %vm289, 1, 0
        %vm1420 = vcmp.eq.s32.totalorder %v1418, 1
        %vm1421 = vcmp.eq.s32.totalorder %v1419, 1
        %1423 = vst [vmem:[#allocation1] ss:$4 sm:$0xff] %v1417
        %v1424 = vld.sshfl [vmem:[#allocation1] sm:$0xff pattern:$0x73625140]
        %v1425 = vld.sshfl [vmem:[#allocation1 + $0x8] sm:$0xff pattern:$0x73625140]
        %v1426 = vld.sshfl [vmem:[#allocation1 + $0x10] sm:$0xff pattern:$0x73625140]
        %1427 = vrot.lane.b32.xlu0 %v1424, 123
        %v1428 = vpop.permute.xlu0 %1427
        %1429 = vrot.lane.b32.xlu0 %v1425, 123
        %v1430 = vpop.permute.xlu0 %1429
        %1431 = vrot.lane.b32.xlu0 %v1426, 123
        %v1432 = vpop.permute.xlu0 %1431
        %vm1433 = vcmask 1006592
        %v1434 = vsel %vm1433, %v1428, %v1430
        %v1435 = vsel %vm1433, %v1430, %v1432
        %v1438 = vsel %vm1420, %v1434, 0.0
        %v1439 = vsel %vm1421, %v1435, 0.0
        %v1440 = vadd.f32 %v1176, %v1438
        %v1441 = vadd.f32 %v1177, %v1439
        %v1442 = vld [vmem:[#allocation2] sm:$0x3f]
        %v1443 = vld [vmem:[%s3] sm:$0x3]
        %1445 = vset.pattern.permute.xlu0 6
        %1446 = vperm.xlu0 %1445, %v1443
        %v1447 = vpop.permute.xlu0 %1446
        %v1449 = vunpack.c.l.s4 269488144
        %v1450 = vunpack.c.0.s8 %v1449
        %v1451 = vperm.slane %v1447, %v1450
        %v1453 = vmul.f32 %v1442, %v1451
        %1454 = vset.pattern.permute.xlu0 13
        %1455 = vperm.xlu0 %1454, %v1443
        %v1456 = vpop.permute.xlu0 %1455
        %v1458 = vunpack.c.l.s4 269488144
        %v1459 = vunpack.c.0.s8 %v1458
        %v1460 = vperm.slane %v1456, %v1459
        %v1462 = vmul.f32 %v1442, %v1460
        %1464 = vrot.lane.b32.xlu0 %v1462, 112
        %v1465 = vpop.permute.xlu0 %1464
        %v1466 = vrot.slane %v1465, 2
        %v1467 = vsel %vm686, %v1465, %v1466
        %v1469 = vadd.f32 %v1453, %v1467
        %1470 = vset.pattern.permute.xlu0 20
        %1471 = vperm.xlu0 %1470, %v1443
        %v1472 = vpop.permute.xlu0 %1471
        %v1474 = vunpack.c.l.s4 269488144
        %v1475 = vunpack.c.0.s8 %v1474
        %v1476 = vperm.slane %v1472, %v1475
        %v1478 = vmul.f32 %v1442, %v1476
        %1480 = vrot.lane.b32.xlu0 %v1478, 96
        %v1481 = vpop.permute.xlu0 %1480
        %v1482 = vrot.slane %v1481, 2
        %v1483 = vsel %vm703, %v1481, %v1482
        %v1485 = vadd.f32 %v1469, %v1483
        %1486 = vset.pattern.permute.xlu0 27
        %1487 = vperm.xlu0 %1486, %v1443
        %v1488 = vpop.permute.xlu0 %1487
        %v1490 = vunpack.c.l.s4 269488144
        %v1491 = vunpack.c.0.s8 %v1490
        %v1492 = vperm.slane %v1488, %v1491
        %v1494 = vmul.f32 %v1442, %v1492
        %1496 = vrot.lane.b32.xlu0 %v1494, 80
        %v1497 = vpop.permute.xlu0 %1496
        %v1498 = vrot.slane %v1497, 2
        %v1499 = vsel %vm720, %v1497, %v1498
        %v1501 = vadd.f32 %v1485, %v1499
        %1502 = vset.pattern.permute.xlu0 34
        %1503 = vperm.xlu0 %1502, %v1443
        %v1504 = vpop.permute.xlu0 %1503
        %v1506 = vunpack.c.l.s4 269488144
        %v1507 = vunpack.c.0.s8 %v1506
        %v1508 = vperm.slane %v1504, %v1507
        %v1510 = vmul.f32 %v1442, %v1508
        %1512 = vrot.lane.b32.xlu0 %v1510, 64
        %v1513 = vpop.permute.xlu0 %1512
        %v1514 = vrot.slane %v1513, 2
        %v1515 = vsel %vm737, %v1513, %v1514
        %v1517 = vadd.f32 %v1501, %v1515
        %1518 = vset.pattern.permute.xlu0 41
        %1519 = vperm.xlu0 %1518, %v1443
        %v1520 = vpop.permute.xlu0 %1519
        %v1522 = vunpack.c.l.s4 269488144
        %v1523 = vunpack.c.0.s8 %v1522
        %v1524 = vperm.slane %v1520, %v1523
        %v1526 = vmul.f32 %v1442, %v1524
        %1528 = vrot.lane.b32.xlu0 %v1526, 48
        %v1529 = vpop.permute.xlu0 %1528
        %v1530 = vrot.slane %v1529, 2
        %v1531 = vsel %vm754, %v1529, %v1530
        %v1533 = vadd.f32 %v1517, %v1531
        %1534 = vset.pattern.permute.xlu0 48
        %1535 = vperm.xlu0 %1534, %v1443
        %v1536 = vpop.permute.xlu0 %1535
        %v1538 = vunpack.c.l.s4 269488144
        %v1539 = vunpack.c.0.s8 %v1538
        %v1540 = vperm.slane %v1536, %v1539
        %v1542 = vmul.f32 %v1442, %v1540
        %1544 = vrot.lane.b32.xlu0 %v1542, 32
        %v1545 = vpop.permute.xlu0 %1544
        %v1546 = vrot.slane %v1545, 2
        %v1547 = vsel %vm401, %v1545, %v1546
        %v1549 = vadd.f32 %v1533, %v1547
        %v1550 = vsel %vm296, 1, 0
        %v1551 = vsel %vm297, 1, 0
        %vm1552 = vcmp.eq.s32.totalorder %v1550, 1
        %vm1553 = vcmp.eq.s32.totalorder %v1551, 1
        %1555 = vst [vmem:[#allocation1] ss:$4 sm:$0xff] %v1549
        %v1556 = vld.sshfl [vmem:[#allocation1] sm:$0xff pattern:$0x73625140]
        %v1557 = vld.sshfl [vmem:[#allocation1 + $0x8] sm:$0xff pattern:$0x73625140]
        %v1558 = vld.sshfl [vmem:[#allocation1 + $0x10] sm:$0xff pattern:$0x73625140]
        %1559 = vrot.lane.b32.xlu0 %v1556, 122
        %v1560 = vpop.permute.xlu0 %1559
        %1561 = vrot.lane.b32.xlu0 %v1557, 122
        %v1562 = vpop.permute.xlu0 %1561
        %1563 = vrot.lane.b32.xlu0 %v1558, 122
        %v1564 = vpop.permute.xlu0 %1563
        %vm1565 = vcmask 998400
        %v1566 = vsel %vm1565, %v1560, %v1562
        %v1567 = vsel %vm1565, %v1562, %v1564
        %v1570 = vsel %vm1552, %v1566, 0.0
        %v1571 = vsel %vm1553, %v1567, 0.0
        %v1572 = vadd.f32 %v1308, %v1570
        %v1573 = vadd.f32 %v1309, %v1571
        %v1574 = vadd.f32 %v1572, %v1440
        %v1575 = vadd.f32 %v1573, %v1441
        %v1576 = vsel %vm439, %v1574, 0.0
        %v1577 = vrot.slane %v1576, 4
        %v1578 = vadd.f32 %v1576, %v1577
        %v1579 = vrot.slane %v1578, 2
        %v1580 = vadd.f32 %v1578, %v1579
        %v1581 = vrot.slane %v1580, 1
        %v1582 = vadd.f32 %v1580, %v1581
        %v1583 = vsel %vm439, %v1575, 0.0
        %v1584 = vrot.slane %v1583, 4
        %v1585 = vadd.f32 %v1583, %v1584
        %v1586 = vrot.slane %v1585, 2
        %v1587 = vadd.f32 %v1585, %v1586
        %v1588 = vrot.slane %v1587, 1
        %v1589 = vadd.f32 %v1587, %v1588
        %v1590 = vxor.u32 %v1582, 2147483648
        %v1591 = vxor.u32 %v1589, 2147483648
        %v1592 = vmul.f32 %v1590, 1.442695
        %v1593 = vpow.pop %v1592
        %v1594 = vmul.f32 %v1591, 1.442695
        %v1595 = vpow.pop %v1594
        %v1596 = vadd.f32 %v1593, 1.0
        %v1597 = vadd.f32 %v1595, 1.0
        %v1598 = vrcp.pop %v1596
        %v1599 = vmul.f32 %v1596, %v1598
        %v1600 = vsub.f32 1.0, %v1599
        %v1601 = vmul.f32 %v1598, %v1600
        %v1602 = vadd.f32 %v1598, %v1601
        %vm1603 = vweird.f32 %v1596
        %vm1604 = vweird.f32 %v1598
        %vm1605 = vmor %vm1603, %vm1604
        %v1606 = vsel %vm1605, %v1598, %v1602
        %v1607 = vand.u32 2147483647, %v1596
        %vm1608 = vcmp.eq.f32.partialorder %v1607, 8.507059e+37
        %v1609 = vand.u32 %v1596, 2147483648
        %v1610 = vor.u32 1.1754944e-38, %v1609
        %v1611 = vsel %vm1608, %v1610, %v1606
        %v1612 = vmul.f32 1.0, %v1611
        %v1613 = vrcp.pop %v1597
        %v1614 = vmul.f32 %v1597, %v1613
        %v1615 = vsub.f32 1.0, %v1614
        %v1616 = vmul.f32 %v1613, %v1615
        %v1617 = vadd.f32 %v1613, %v1616
        %vm1618 = vweird.f32 %v1597
        %vm1619 = vweird.f32 %v1613
        %vm1620 = vmor %vm1618, %vm1619
        %v1621 = vsel %vm1620, %v1613, %v1617
        %v1622 = vand.u32 2147483647, %v1597
        %vm1623 = vcmp.eq.f32.partialorder %v1622, 8.507059e+37
        %v1624 = vand.u32 %v1597, 2147483648
        %v1625 = vor.u32 1.1754944e-38, %v1624
        %v1626 = vsel %vm1623, %v1625, %v1621
        %v1627 = vmul.f32 1.0, %v1626
        %v1628 = vmul.f32 %v560, %v1612
        %v1629 = vmul.f32 %v561, %v1627
        %v1630 = vmul.f32 %v562, %v1612
        %v1631 = vmul.f32 %v563, %v1627
        %v1632 = vmul.f32 %v564, %v1612
        %v1633 = vmul.f32 %v565, %v1627
        %v1634 = vmul.f32 %v566, %v1612
        %v1635 = vmul.f32 %v567, %v1627
        %1636 = vst [vmem:[%s217] sm:$0xff] %v1628
        %1637 = vst [vmem:[%s217 + $0x8] sm:$0xff] %v1629
        %1638 = vst [vmem:[%s217 + $0x10] sm:$0xff] %v1630
        %1639 = vst [vmem:[%s217 + $0x18] sm:$0xff] %v1631
        %1640 = vst [vmem:[%s217 + $0x20] sm:$0xff] %v1632
        %1641 = vst [vmem:[%s217 + $0x28] sm:$0xff] %v1633
        %1642 = vst [vmem:[%s217 + $0x30] sm:$0xff] %v1634
        %1643 = vst [vmem:[%s217 + $0x38] sm:$0xff] %v1635
        %s1644 = sand.u32 %s118, 1
        %s1645 = scalar_lea.sflag [#allocation5], %s1644
        %s1646 = sand.u32 %s118, 1
        %s1647 = smul.addr %s1646, 64
        %s1648 = scalar_lea.vmem [#allocation6], %s1647
        // Predicated region
        $region41: #{tpu_custom_call.1} parent=35 // pred_check
          %p1649 = pneg %p128
        $region42: #{tpu_custom_call.1} parent=35 // pred_check_branch
          %1651 = sbr.rel (%p1649) target = $region44
        $region43: #{tpu_custom_call.1} parent=35 // pred_region
          %1653 = vsyncadd %s1645, 0
          %s1654 = smul.addr %s21, 8
          %s1655 = smul.addr %s1654, 8
          %s1656 = scalar_lea.hbm %s4, %s1655
          %s1657 = sshll.u32 %s1648, 4
          %s1658 = int_to_ptr.vmem [resolvable:$true] %s1657
          %s1659 = sshll.u32 %s1656, 4
          %s1660 = int_to_ptr.hbm [resolvable:$true] %s1659
          %1665 = dma.vmem_to_hbm [thread:$0]  %s1658, 1024, %s1660, %s1645, 256, 256, 16
        $region44: #{tpu_custom_call.1} parent=35 // pred_fallthru
          _
      $region36: #{tpu_custom_call.1} parent=5 // pred_fallthru
        _
      %p1666 = scmp.le.s32.totalorder 2, %s16
      // Predicated region
      $region45: #{tpu_custom_call.1} parent=5 // pred_check
        %p1667 = pneg %p1666
      $region46: #{tpu_custom_call.1} parent=5 // pred_check_branch
        %1669 = sbr.rel (%p1667) target = $region48
      $region47: #{tpu_custom_call.1} parent=5 // pred_region
        %s1670 = ssub.s32 %s16, 2
        // Predicated region
        $region49: #{tpu_custom_call.1} parent=47 // pred_check
          %p1671 = pneg %p134
        $region50: #{tpu_custom_call.1} parent=47 // pred_check_branch
          %1673 = sbr.rel (%p1671) target = $region52
        $region51: #{tpu_custom_call.1} parent=47 // pred_region
          %s1674 = sand.u32 %s119, 1
          %s1675 = scalar_lea.sflag [#allocation5], %s1674
          %s1676 = sand.u32 %s119, 1
          %s1677 = smul.addr %s1676, 64
          %s1678 = scalar_lea.vmem [#allocation6], %s1677
          %1680 = dma.done %s1675, 1024
        $region52: #{tpu_custom_call.1} parent=47 // pred_fallthru
          _
      $region48: #{tpu_custom_call.1} parent=5 // pred_fallthru
        _
    $region6: #{tpu_custom_call.1} parent=1 // loop_footer
      %s20 = sadd.s32 1, %s16
    $region7: #{tpu_custom_call.1} parent=1 // loop_footer_branch
      %15 = sbr.rel target = $region3
    $region8: #{tpu_custom_call.1} parent=1 // loop_exit
      _
    %1681 = vsyncpa [#allocation4], 1
    %s1682 = scalar_lea.sflag [#allocation4], 1
    %1683 = vsyncpa %s1682, 1
    %1684 = vsyncpa [#allocation5], 1
    %s1685 = scalar_lea.sflag [#allocation5], 1
    %1686 = vsyncpa %s1685, 1

</llo_original>
